<compile_context>
chip_gen: v5e
topology: v5e:2x2
jax: 0.10.0
libtpu: 0.0.40
codegen_flags: <defaults>
</compile_context>

<pallas_src>
import jax
import jax.numpy as jnp
from jax.experimental import pallas as pl
from jax.experimental.pallas import tpu as pltpu


def _cdiv(a, b):
    return (a + b - 1) // b


def _round_up(v, m):
    return _cdiv(v, m) * m


def _pad2(a, rows, cols):
    r, c = a.shape
    if (r, c) == (rows, cols):
        return a
    return jnp.pad(a, ((0, rows - r), (0, cols - c)))


def _device_profile():
    """Returns (tensorcores_per_chip, vmem_limit_bytes, tile_budget_bytes)."""
    try:
        kind = jax.devices()[0].device_kind.lower()
    except Exception:
        kind = ""
    if "v7" in kind:
        return 2, 48 << 20, 36 << 20   # v7x: 2 TCs, 64 MiB physical VMEM / TC
    if "v6" in kind:
        return 1, 64 << 20, 48 << 20   # v6e: 1 TC, 128 MiB physical VMEM
    if "v5" in kind:
        return 1, 32 << 20, 24 << 20   # v5e: 1 TC, 16 MiB scoped default
    return 1, 32 << 20, 24 << 20       # unknown chip: stay conservative


def generator_kernel(x_ref, w1_ref, b1_ref, w2_ref, b2_ref, o_ref, h_ref):
    """out = sigmoid(relu(x @ W1 + b1) @ W2 + b2), fused in one kernel."""
    # Hidden activations: computed once per batch tile (first image tile),
    # bias+ReLU in f32, cast once to the matmul dtype, reused for every j.
    @pl.when(pl.program_id(1) == 0)
    def _():
        h = jnp.dot(x_ref[...], w1_ref[...], preferred_element_type=jnp.float32)
        h_ref[...] = jnp.maximum(h + b1_ref[...], 0.0).astype(h_ref.dtype)

    logits = jnp.dot(h_ref[...], w2_ref[...],
                     preferred_element_type=jnp.float32) + b2_ref[...]
    # sigmoid(x) = 0.5*tanh(0.5*x) + 0.5: single EUP transcendental, the
    # mul/add ride the VALU (which has slack), and no exp overflow.
    o_ref[...] = (0.5 * jnp.tanh(0.5 * logits) + 0.5).astype(o_ref.dtype)


def generator_forward(x, w1, b1, w2, b2, *, batch_tile=None, image_tile=None,
                      matmul_dtype=jnp.bfloat16, out_dtype=jnp.bfloat16):
    """x:[B,z], w1:[z,h] (pre-transposed from torch [out,in]), b1:[1,h],
    w2:[h,image], b2:[1,image]  ->  [B, image] in `out_dtype`."""
    B, z_dim = x.shape
    hidden_dim = w1.shape[1]
    image_size = w2.shape[1]
    f32 = jnp.float32

    num_tc, vmem_limit, tile_budget = _device_profile()
    mm_bytes = jnp.dtype(matmul_dtype).itemsize
    out_bytes = jnp.dtype(out_dtype).itemsize

    # ---- lane/sublane-dense padded shapes --------------------------------
    zp = _round_up(z_dim, 128)           # contraction dim of matmul 1
    hp = _round_up(hidden_dim, 128)      # lanes of h / contraction of matmul 2
    ip0 = _round_up(image_size, 128)     # lane-padded output width

    # Batch tile, sublane-packed for the matmul dtype (16 rows/vreg for bf16).
    sub = 8 * max(1, 4 // mm_bytes)
    if batch_tile is not None:
        tb = _round_up(batch_tile, sub)
        Bp = _round_up(B, tb)
    elif num_tc >= 2 and B >= 4 * sub:
        # v7x: EVEN number of batch tiles so both TensorCores get equal work.
        n_bt = max(2, 2 * _cdiv(B, 512))
        tb = _round_up(_cdiv(B, n_bt), sub)
        Bp = tb * n_bt
    elif B <= 512:
        # Single-TC (v5e/v6e): the grid is a serial loop, so one batch tile
        # avoids per-step overhead and maximizes the MXU M tile.
        tb = _round_up(B, sub)
        Bp = tb
    else:
        tb = 256
        Bp = _round_up(B, tb)

    # Image-column tile: VMEM-budget driven, multiple of 128, chosen to nearly
    # divide ip0 so we don't burn MXU/vst/DMA on zero-padded columns.
    fixed_bytes = (2 * tb * zp * mm_bytes      # x (double-buffered)
                   + 2 * zp * hp * mm_bytes    # W1
                   + 2 * hp * 4                # b1 (f32)
                   + tb * hp * mm_bytes)       # h scratch
    per_col_bytes = 2 * hp * mm_bytes + 2 * 4 + 2 * tb * out_bytes
    if image_tile is not None:
        tn = _round_up(image_tile, 128)
    else:
        tn_max = max(128, ((tile_budget - fixed_bytes) // per_col_bytes)
                     // 128 * 128)
        n_it = _cdiv(ip0, min(tn_max, ip0))
        tn = _round_up(_cdiv(ip0, n_it), 128)
    ip = _cdiv(ip0, tn) * tn

    # ---- pad + cast (bf16 matmul inputs, f32 biases) ----------------------
    xp = _pad2(x, Bp, zp).astype(matmul_dtype)
    w1p = _pad2(w1, zp, hp).astype(matmul_dtype)
    b1p = _pad2(b1, 1, hp).astype(f32)
    w2p = _pad2(w2, hp, ip).astype(matmul_dtype)
    b2p = _pad2(b2, 1, ip).astype(f32)

    grid = (Bp // tb, ip // tn)
    out = pl.pallas_call(
        generator_kernel,
        out_shape=jax.ShapeDtypeStruct((Bp, ip), out_dtype),
        grid_spec=pltpu.PrefetchScalarGridSpec(
            num_scalar_prefetch=0,
            grid=grid,
            in_specs=[
                pl.BlockSpec((tb, zp), lambda i, j: (i, 0)),   # x batch tile
                pl.BlockSpec((zp, hp), lambda i, j: (0, 0)),   # W1 (resident)
                pl.BlockSpec((1, hp), lambda i, j: (0, 0)),    # b1 (resident)
                pl.BlockSpec((hp, tn), lambda i, j: (0, j)),   # W2 column tile
                pl.BlockSpec((1, tn), lambda i, j: (0, j)),    # b2 column tile
            ],
            out_specs=pl.BlockSpec((tb, tn), lambda i, j: (i, j)),
            scratch_shapes=[pltpu.VMEM((tb, hp), matmul_dtype)],  # hidden acts
        ),
        compiler_params=pltpu.CompilerParams(
            dimension_semantics=("parallel", "arbitrary"),
            vmem_limit_bytes=vmem_limit),
    )(xp, w1p, b1p, w2p, b2p)

    return out[:B, :image_size]


def init_params(key, z_dim, hidden_dim, image_size):
    """Deterministic init mimicking nn.Linear's uniform(+-1/sqrt(fan_in))."""
    k1, k2, k3, k4 = jax.random.split(key, 4)
    lim1 = 1.0 / jnp.sqrt(z_dim)
    lim2 = 1.0 / jnp.sqrt(hidden_dim)
    # Stored already transposed to [in, out] so the kernel does x @ W.
    w1 = jax.random.uniform(k1, (z_dim, hidden_dim), jnp.float32, -lim1, lim1)
    b1 = jax.random.uniform(k2, (1, hidden_dim), jnp.float32, -lim1, lim1)
    w2 = jax.random.uniform(k3, (hidden_dim, image_size), jnp.float32, -lim2, lim2)
    b2 = jax.random.uniform(k4, (1, image_size), jnp.float32, -lim2, lim2)
    return w1, b1, w2, b2


if __name__ == "__main__":
    # MNIST-like GAN generator shapes.
    batch, z_dim, hidden_dim, image_size = 256, 64, 128, 784

    key = jax.random.PRNGKey(0)
    kx, kp = jax.random.split(key)
    x = jax.random.normal(kx, (batch, z_dim), dtype=jnp.float32)
    w1, b1, w2, b2 = init_params(kp, z_dim, hidden_dim, image_size)

    # Default bf16-MXU / bf16-output path, plus a full-f32 path for a tight
    # accuracy check against the pure-JAX reference.
    out_bf16 = jax.block_until_ready(generator_forward(x, w1, b1, w2, b2))
    out_f32 = jax.block_until_ready(
        generator_forward(x, w1, b1, w2, b2,
                          matmul_dtype=jnp.float32, out_dtype=jnp.float32))

    # Pure-JAX references (same semantics as the PyTorch forward).
    def ref_fwd(dt):
        h = jnp.maximum(
            jnp.dot(x.astype(dt), w1.astype(dt),
                    preferred_element_type=jnp.float32) + b1, 0.0)
        logits = jnp.dot(h.astype(dt), w2.astype(dt),
                         preferred_element_type=jnp.float32) + b2
        return jax.nn.sigmoid(logits)

    assert out_bf16.shape == (batch, image_size)
    assert out_bf16.dtype == jnp.bfloat16
    assert out_f32.shape == (batch, image_size)
    # f32 path: matches the reference up to the tanh-form sigmoid rounding.
    assert jnp.allclose(out_f32, ref_fwd(jnp.float32), atol=2e-3)
    # bf16 path: compare against a bf16-matmul/f32-accumulate reference;
    # extra slack covers the bf16 output quantization (values in [0, 1]).
    assert jnp.allclose(out_bf16.astype(jnp.float32), ref_fwd(jnp.bfloat16),
                        atol=1e-2)

    print("KERNEL_OK")
</pallas_src>

<mosaic_0001>
module attributes {stable_mosaic.version = 11 : i64} {
  func.func @generator_kernel(%arg0: i32, %arg1: i32, %arg2: memref<256x128xbf16, #tpu.memory_space<vmem>>, %arg3: memref<128x128xbf16, #tpu.memory_space<vmem>>, %arg4: memref<1x128xf32, #tpu.memory_space<vmem>>, %arg5: memref<128x896xbf16, #tpu.memory_space<vmem>>, %arg6: memref<1x896xf32, #tpu.memory_space<vmem>>, %arg7: memref<256x896xbf16, #tpu.memory_space<vmem>>, %arg8: memref<256x128xbf16, #tpu.memory_space<vmem>>) attributes {dimension_semantics = [#tpu.dimension_semantics<parallel>, #tpu.dimension_semantics<arbitrary>], iteration_bounds = array<i64: 1, 1>, scalar_prefetch = 0 : i64, scratch_operands = 1 : i64, tpu.core_type = #tpu.core_type<tc>, window_params = [{transform_indices = @transform_0, window_bounds = array<i64: 256, 128>}, {pipeline_mode = #tpu.pipeline_mode<synchronous>, transform_indices = @transform_1, window_bounds = array<i64: 128, 128>}, {pipeline_mode = #tpu.pipeline_mode<synchronous>, transform_indices = @transform_2, window_bounds = array<i64: 1, 128>}, {transform_indices = @transform_3, window_bounds = array<i64: 128, 896>}, {transform_indices = @transform_4, window_bounds = array<i64: 1, 896>}, {transform_indices = @transform_5, window_bounds = array<i64: 256, 896>}]} {
    %c0_i32 = arith.constant 0 : i32
    %0 = arith.cmpi eq, %arg1, %c0_i32 : i32
    %1 = arith.extui %0 : i1 to i32
    %c0_i32_0 = arith.constant 0 : i32
    %2 = arith.cmpi ne, %1, %c0_i32_0 : i32
    scf.if %2 {
      %c0_11 = arith.constant 0 : index
      %c0_12 = arith.constant 0 : index
      %18 = vector.load %arg2[%c0_11, %c0_12] : memref<256x128xbf16, #tpu.memory_space<vmem>>, vector<256x128xbf16>
      %c0_13 = arith.constant 0 : index
      %c0_14 = arith.constant 0 : index
      %19 = vector.load %arg3[%c0_13, %c0_14] : memref<128x128xbf16, #tpu.memory_space<vmem>>, vector<128x128xbf16>
      %cst_15 = arith.constant dense<0.000000e+00> : vector<256x128xf32>
      %20 = tpu.matmul %18, %19, %cst_15 {dimension_numbers = #tpu.dot_dimension_numbers<[1], [0], [0], [1], [0, 0, 1, 1], [], []>} : vector<256x128xbf16>, vector<128x128xbf16>, vector<256x128xf32> -> vector<256x128xf32>
      %c0_16 = arith.constant 0 : index
      %c0_17 = arith.constant 0 : index
      %21 = vector.load %arg4[%c0_16, %c0_17] : memref<1x128xf32, #tpu.memory_space<vmem>>, vector<1x128xf32>
      %22 = vector.broadcast %21 : vector<1x128xf32> to vector<256x128xf32>
      %23 = arith.addf %20, %22 : vector<256x128xf32>
      %cst_18 = arith.constant 0.000000e+00 : f32
      %24 = vector.broadcast %cst_18 : f32 to vector<256x128xf32>
      %25 = arith.maximumf %23, %24 : vector<256x128xf32>
      %26 = arith.truncf %25 : vector<256x128xf32> to vector<256x128xbf16>
      %c0_19 = arith.constant 0 : index
      %c0_20 = arith.constant 0 : index
      %27 = vector.load %arg8[%c0_19, %c0_20] : memref<256x128xbf16, #tpu.memory_space<vmem>>, vector<256x128xbf16>
      tpu.vector_store %arg8[%c0_19, %c0_20], %26 {strides = array<i32>} : memref<256x128xbf16, #tpu.memory_space<vmem>>, vector<256x128xbf16>,
    } else {
    }
    %c0 = arith.constant 0 : index
    %c0_1 = arith.constant 0 : index
    %3 = vector.load %arg8[%c0, %c0_1] : memref<256x128xbf16, #tpu.memory_space<vmem>>, vector<256x128xbf16>
    %c0_2 = arith.constant 0 : index
    %c0_3 = arith.constant 0 : index
    %4 = vector.load %arg5[%c0_2, %c0_3] : memref<128x896xbf16, #tpu.memory_space<vmem>>, vector<128x896xbf16>
    %cst = arith.constant dense<0.000000e+00> : vector<256x896xf32>
    %5 = tpu.matmul %3, %4, %cst {dimension_numbers = #tpu.dot_dimension_numbers<[1], [0], [0], [1], [0, 0, 1, 1], [], []>} : vector<256x128xbf16>, vector<128x896xbf16>, vector<256x896xf32> -> vector<256x896xf32>
    %c0_4 = arith.constant 0 : index
    %c0_5 = arith.constant 0 : index
    %6 = vector.load %arg6[%c0_4, %c0_5] : memref<1x896xf32, #tpu.memory_space<vmem>>, vector<1x896xf32>
    %7 = vector.broadcast %6 : vector<1x896xf32> to vector<256x896xf32>
    %8 = arith.addf %5, %7 : vector<256x896xf32>
    %cst_6 = arith.constant 5.000000e-01 : f32
    %9 = vector.broadcast %cst_6 : f32 to vector<256x896xf32>
    %10 = arith.mulf %9, %8 : vector<256x896xf32>
    %11 = math.tanh %10 : vector<256x896xf32>
    %cst_7 = arith.constant 5.000000e-01 : f32
    %12 = vector.broadcast %cst_7 : f32 to vector<256x896xf32>
    %13 = arith.mulf %12, %11 : vector<256x896xf32>
    %cst_8 = arith.constant 5.000000e-01 : f32
    %14 = vector.broadcast %cst_8 : f32 to vector<256x896xf32>
    %15 = arith.addf %13, %14 : vector<256x896xf32>
    %16 = arith.truncf %15 : vector<256x896xf32> to vector<256x896xbf16>
    %c0_9 = arith.constant 0 : index
    %c0_10 = arith.constant 0 : index
    %17 = vector.load %arg7[%c0_9, %c0_10] : memref<256x896xbf16, #tpu.memory_space<vmem>>, vector<256x896xbf16>
    tpu.vector_store %arg7[%c0_9, %c0_10], %16 {strides = array<i32>} : memref<256x896xbf16, #tpu.memory_space<vmem>>, vector<256x896xbf16>,
    return
  }
  func.func @transform_0(%arg0: i32, %arg1: i32) -> (i32, i32) {
    %c0_i32 = arith.constant 0 : i32
    %c0_i32_0 = arith.constant 0 : i32
    return %arg0, %c0_i32 : i32, i32
  }
  func.func @transform_1(%arg0: i32, %arg1: i32) -> (i32, i32) {
    %c0_i32 = arith.constant 0 : i32
    %c0_i32_0 = arith.constant 0 : i32
    %c0_i32_1 = arith.constant 0 : i32
    return %c0_i32, %c0_i32_0 : i32, i32
  }
  func.func @transform_2(%arg0: i32, %arg1: i32) -> (i32, i32) {
    %c0_i32 = arith.constant 0 : i32
    %c0_i32_0 = arith.constant 0 : i32
    %c0_i32_1 = arith.constant 0 : i32
    return %c0_i32, %c0_i32_0 : i32, i32
  }
  func.func @transform_3(%arg0: i32, %arg1: i32) -> (i32, i32) {
    %c0_i32 = arith.constant 0 : i32
    %c0_i32_0 = arith.constant 0 : i32
    return %c0_i32, %arg1 : i32, i32
  }
  func.func @transform_4(%arg0: i32, %arg1: i32) -> (i32, i32) {
    %c0_i32 = arith.constant 0 : i32
    %c0_i32_0 = arith.constant 0 : i32
    return %c0_i32, %arg1 : i32, i32
  }
  func.func @transform_5(%arg0: i32, %arg1: i32) -> (i32, i32) {
    %c0_i32 = arith.constant 0 : i32
    return %arg0, %arg1 : i32, i32
  }
}

</mosaic_0001>

<llo_original>
// kernel: tpu_custom_call.1
$region0: #{tpu_custom_call.1}
  #allocation0 [shape = 'u32[]', space=smem, size = 0x4, offset = 0x4, fixed_abs, tag = 'smem constant byte address 0x4 - core index']
  #allocation1 [shape = 'u32[72,128]{1,0:T(1,128)}', space=vmem, size = 0x9000, scoped, tag = 'internal scratch']
  #allocation2 [shape = 'bf16[256,128]{1,0:T(8,128)(2,1)}', space=vmem, size = 0x10000, scoped, tag = 'scratch operand']
  %s0 = inlined_call_operand.hbm [shape: bf16[256,128], index: 0, kind: input, shape index: {}]
  %s1 = inlined_call_operand.hbm [shape: bf16[128,128], index: 1, kind: input, shape index: {}]
  %s2 = inlined_call_operand.vmem [shape: f32[1,128], index: 2, kind: input, shape index: {}]
  %s3 = inlined_call_operand.hbm [shape: bf16[128,896], index: 3, kind: input, shape index: {}]
  %s4 = inlined_call_operand.hbm [shape: f32[1,896], index: 4, kind: input, shape index: {}]
  %s5 = inlined_call_operand.hbm [shape: bf16[256,896], index: 5, kind: output, shape index: {}]
  %s6 = sld [smem:[#allocation0]]
  $region50: #{tpu_custom_call.1} parent=0
    _
  %s8 = ssub.s32 1, %s6
  %s9 = scalar_select 0, %s8, %s6
  $region1: #{tpu_custom_call.1} parent=0
    #allocation3 [shape = 'u8[65536]{0}', space=vmem, size = 0x10000, scoped, tag = 'input window, operand 0, single buffered']
    #allocation4 [shape = 's32[1]{0}', space=sflag, size = 0x4, scoped, tag = 'scoped memory for tpu_custom_call.1']
    #allocation5 [shape = 's32[1]{0}', space=sflag, size = 0x4, scoped, tag = 'scoped memory for tpu_custom_call.1']
    #allocation6 [shape = 'u8[32768]{0}', space=vmem, size = 0x8000, scoped, tag = 'input window, operand 1, single buffered']
    #allocation7 [shape = 's32[1]{0}', space=sflag, size = 0x4, scoped, tag = 'scoped memory for tpu_custom_call.1']
    #allocation8 [shape = 'u8[229376]{0}', space=vmem, size = 0x38000, scoped, tag = 'input window, operand 3, single buffered']
    #allocation9 [shape = 'u8[3584]{0}', space=vmem, size = 0x1000, scoped, tag = 'input window, operand 4, single buffered']
    #allocation10 [shape = 's32[1]{0}', space=sflag, size = 0x4, scoped, tag = 'scoped memory for tpu_custom_call.1']
    #allocation11 [shape = 'u8[458752]{0}', space=vmem, size = 0x70000, scoped, tag = 'output window, operand 0, single buffered']
    %10 = vsyncpa [#allocation4], 0
    %11 = vsyncpa [#allocation7], 0
    %12 = vsyncpa [#allocation10], 0
    %13 = vsyncpa [#allocation5], 0
    // Predicated region
    $region2: #{tpu_custom_call.1} parent=1 // pred_check
      _
    $region3: #{tpu_custom_call.1} parent=1 // pred_check_branch
      %15 = sbr.rel (0) target = $region5
    $region4: #{tpu_custom_call.1} parent=1 // pred_region
      %17 = vsyncadd [#allocation4], 0
      %s18 = sshll.u32 %s0, 4
      %s19 = int_to_ptr.hbm [resolvable:$true] %s18
      %s20 = sshll.u32 [#allocation3], 4
      %s21 = int_to_ptr.vmem [resolvable:$true] %s20
      %26 = dma.hbm_to_vmem [thread:$0]  %s19, 2048, %s21, [#allocation4], 64, 64, 4
    $region5: #{tpu_custom_call.1} parent=1 // pred_fallthru
      _
    // Predicated region
    $region6: #{tpu_custom_call.1} parent=1 // pred_check
      _
    $region7: #{tpu_custom_call.1} parent=1 // pred_check_branch
      %28 = sbr.rel (0) target = $region9
    $region8: #{tpu_custom_call.1} parent=1 // pred_region
      %30 = vsyncadd [#allocation7], 0
      %s31 = sshll.u32 %s1, 4
      %s32 = int_to_ptr.hbm [resolvable:$true] %s31
      %s33 = sshll.u32 [#allocation6], 4
      %s34 = int_to_ptr.vmem [resolvable:$true] %s33
      %39 = dma.hbm_to_vmem [thread:$0]  %s32, 1024, %s34, [#allocation7], 64, 64, 4
    $region9: #{tpu_custom_call.1} parent=1 // pred_fallthru
      _
    // Predicated region
    $region10: #{tpu_custom_call.1} parent=1 // pred_check
      _
    $region11: #{tpu_custom_call.1} parent=1 // pred_check_branch
      %41 = sbr.rel (0) target = $region13
    $region12: #{tpu_custom_call.1} parent=1 // pred_region
      _
    $region13: #{tpu_custom_call.1} parent=1 // pred_fallthru
      _
    // Predicated region
    $region14: #{tpu_custom_call.1} parent=1 // pred_check
      _
    $region15: #{tpu_custom_call.1} parent=1 // pred_check_branch
      %43 = sbr.rel (0) target = $region17
    $region16: #{tpu_custom_call.1} parent=1 // pred_region
      %45 = vsyncadd [#allocation7], 0
      %s46 = sshll.u32 %s3, 4
      %s47 = int_to_ptr.hbm [resolvable:$true] %s46
      %s48 = sshll.u32 [#allocation8], 4
      %s49 = int_to_ptr.vmem [resolvable:$true] %s48
      %54 = dma.hbm_to_vmem [thread:$0]  %s47, 7168, %s49, [#allocation7], 448, 448, 28
    $region17: #{tpu_custom_call.1} parent=1 // pred_fallthru
      _
    // Predicated region
    $region18: #{tpu_custom_call.1} parent=1 // pred_check
      _
    $region19: #{tpu_custom_call.1} parent=1 // pred_check_branch
      %56 = sbr.rel (0) target = $region21
    $region20: #{tpu_custom_call.1} parent=1 // pred_region
      %58 = vsyncadd [#allocation10], 0
      %s60 = sshll.u32 %s4, 4
      %s61 = int_to_ptr.hbm [resolvable:$true] %s60
      %s62 = sshll.u32 [#allocation9], 4
      %s63 = int_to_ptr.vmem [resolvable:$true] %s62
      %65 = dma.hbm_to_vmem [thread:$0]  %s61, 112, %s63, [#allocation10]
    $region21: #{tpu_custom_call.1} parent=1 // pred_fallthru
      _
    // Predicated region
    $region22: #{tpu_custom_call.1} parent=1 // pred_check
      _
    $region23: #{tpu_custom_call.1} parent=1 // pred_check_branch
      %67 = sbr.rel (0) target = $region25
    $region24: #{tpu_custom_call.1} parent=1 // pred_region
      %69 = dma.done [#allocation4], 2048
    $region25: #{tpu_custom_call.1} parent=1 // pred_fallthru
      _
    // Predicated region
    $region26: #{tpu_custom_call.1} parent=1 // pred_check
      _
    $region27: #{tpu_custom_call.1} parent=1 // pred_check_branch
      %71 = sbr.rel (0) target = $region29
    $region28: #{tpu_custom_call.1} parent=1 // pred_region
      %73 = dma.done [#allocation7], 1024
    $region29: #{tpu_custom_call.1} parent=1 // pred_fallthru
      _
    // Predicated region
    $region30: #{tpu_custom_call.1} parent=1 // pred_check
      _
    $region31: #{tpu_custom_call.1} parent=1 // pred_check_branch
      %75 = sbr.rel (0) target = $region33
    $region32: #{tpu_custom_call.1} parent=1 // pred_region
      %77 = dma.done [#allocation7], 7168
    $region33: #{tpu_custom_call.1} parent=1 // pred_fallthru
      _
    // Predicated region
    $region34: #{tpu_custom_call.1} parent=1 // pred_check
      _
    $region35: #{tpu_custom_call.1} parent=1 // pred_check_branch
      %79 = sbr.rel (0) target = $region37
    $region36: #{tpu_custom_call.1} parent=1 // pred_region
      %81 = dma.done [#allocation10], 112
    $region37: #{tpu_custom_call.1} parent=1 // pred_fallthru
      _
    %p82 = scmp.eq.s32.totalorder 0, 0
    // Predicated region
    $region38: #{tpu_custom_call.1} parent=1 // pred_check
      %p83 = pneg %p82
    $region39: #{tpu_custom_call.1} parent=1 // pred_check_branch
      %85 = sbr.rel (%p83) target = $region41
    $region40: #{tpu_custom_call.1} parent=1 // pred_region
      %v86 = vld [vmem:[#allocation3] sm:$0xf]
      %v87 = vld [vmem:[#allocation3 + $0x4] sm:$0xf]
      %v88 = vld [vmem:[#allocation3 + $0x8] sm:$0xf]
      %v89 = vld [vmem:[#allocation3 + $0xc] sm:$0xf]
      %v90 = vld [vmem:[#allocation3 + $0x10] sm:$0xf]
      %v91 = vld [vmem:[#allocation3 + $0x14] sm:$0xf]
      %v92 = vld [vmem:[#allocation3 + $0x18] sm:$0xf]
      %v93 = vld [vmem:[#allocation3 + $0x1c] sm:$0xf]
      %v94 = vld [vmem:[#allocation3 + $0x20] sm:$0xf]
      %v95 = vld [vmem:[#allocation3 + $0x24] sm:$0xf]
      %v96 = vld [vmem:[#allocation3 + $0x28] sm:$0xf]
      %v97 = vld [vmem:[#allocation3 + $0x2c] sm:$0xf]
      %v98 = vld [vmem:[#allocation3 + $0x30] sm:$0xf]
      %v99 = vld [vmem:[#allocation3 + $0x34] sm:$0xf]
      %v100 = vld [vmem:[#allocation3 + $0x38] sm:$0xf]
      %v101 = vld [vmem:[#allocation3 + $0x3c] sm:$0xf]
      %v102 = vld [vmem:[#allocation3 + $0x40] sm:$0xf]
      %v103 = vld [vmem:[#allocation3 + $0x44] sm:$0xf]
      %v104 = vld [vmem:[#allocation3 + $0x48] sm:$0xf]
      %v105 = vld [vmem:[#allocation3 + $0x4c] sm:$0xf]
      %v106 = vld [vmem:[#allocation3 + $0x50] sm:$0xf]
      %v107 = vld [vmem:[#allocation3 + $0x54] sm:$0xf]
      %v108 = vld [vmem:[#allocation3 + $0x58] sm:$0xf]
      %v109 = vld [vmem:[#allocation3 + $0x5c] sm:$0xf]
      %v110 = vld [vmem:[#allocation3 + $0x60] sm:$0xf]
      %v111 = vld [vmem:[#allocation3 + $0x64] sm:$0xf]
      %v112 = vld [vmem:[#allocation3 + $0x68] sm:$0xf]
      %v113 = vld [vmem:[#allocation3 + $0x6c] sm:$0xf]
      %v114 = vld [vmem:[#allocation3 + $0x70] sm:$0xf]
      %v115 = vld [vmem:[#allocation3 + $0x74] sm:$0xf]
      %v116 = vld [vmem:[#allocation3 + $0x78] sm:$0xf]
      %v117 = vld [vmem:[#allocation3 + $0x7c] sm:$0xf]
      %v118 = vld [vmem:[#allocation6] sm:$0xf]
      %v119 = vld [vmem:[#allocation6 + $0x4] sm:$0xf]
      %v120 = vld [vmem:[#allocation6 + $0x8] sm:$0xf]
      %v121 = vld [vmem:[#allocation6 + $0xc] sm:$0xf]
      %v122 = vld [vmem:[#allocation6 + $0x10] sm:$0xf]
      %v123 = vld [vmem:[#allocation6 + $0x14] sm:$0xf]
      %v124 = vld [vmem:[#allocation6 + $0x18] sm:$0xf]
      %v125 = vld [vmem:[#allocation6 + $0x1c] sm:$0xf]
      %v126 = vld [vmem:[#allocation6 + $0x20] sm:$0xf]
      %v127 = vld [vmem:[#allocation6 + $0x24] sm:$0xf]
      %v128 = vld [vmem:[#allocation6 + $0x28] sm:$0xf]
      %v129 = vld [vmem:[#allocation6 + $0x2c] sm:$0xf]
      %v130 = vld [vmem:[#allocation6 + $0x30] sm:$0xf]
      %v131 = vld [vmem:[#allocation6 + $0x34] sm:$0xf]
      %v132 = vld [vmem:[#allocation6 + $0x38] sm:$0xf]
      %v133 = vld [vmem:[#allocation6 + $0x3c] sm:$0xf]
      %v134 = vld [vmem:[%s2] sm:$0x1]
      %v136 = vperm.slane %v134, 0
      %v170 = vunpack.c.l.b16 %v86
      %v171 = vunpack.c.l.b16 %v87
      %v172 = vunpack.c.l.b16 %v88
      %v173 = vunpack.c.l.b16 %v89
      %v174 = vunpack.c.l.b16 %v90
      %v175 = vunpack.c.l.b16 %v91
      %v176 = vunpack.c.l.b16 %v92
      %v177 = vunpack.c.l.b16 %v93
      %v178 = vunpack.c.l.b16 %v94
      %v179 = vunpack.c.l.b16 %v95
      %v180 = vunpack.c.l.b16 %v96
      %v181 = vunpack.c.l.b16 %v97
      %v182 = vunpack.c.l.b16 %v98
      %v183 = vunpack.c.l.b16 %v99
      %v184 = vunpack.c.l.b16 %v100
      %v185 = vunpack.c.l.b16 %v101
      %v186 = vunpack.c.l.b16 %v102
      %v187 = vunpack.c.l.b16 %v103
      %v188 = vunpack.c.l.b16 %v104
      %v189 = vunpack.c.l.b16 %v105
      %v190 = vunpack.c.l.b16 %v106
      %v191 = vunpack.c.l.b16 %v107
      %v192 = vunpack.c.l.b16 %v108
      %v193 = vunpack.c.l.b16 %v109
      %v194 = vunpack.c.l.b16 %v110
      %v195 = vunpack.c.l.b16 %v111
      %v196 = vunpack.c.l.b16 %v112
      %v197 = vunpack.c.l.b16 %v113
      %v198 = vunpack.c.l.b16 %v114
      %v199 = vunpack.c.l.b16 %v115
      %v200 = vunpack.c.l.b16 %v116
      %v201 = vunpack.c.l.b16 %v117
      %v202 = vpack.c.b16 %v171, %v170
      %v203 = vpack.c.b16 %v173, %v172
      %v204 = vpack.c.b16 %v175, %v174
      %v205 = vpack.c.b16 %v177, %v176
      %v206 = vpack.c.b16 %v179, %v178
      %v207 = vpack.c.b16 %v181, %v180
      %v208 = vpack.c.b16 %v183, %v182
      %v209 = vpack.c.b16 %v185, %v184
      %v210 = vpack.c.b16 %v187, %v186
      %v211 = vpack.c.b16 %v189, %v188
      %v212 = vpack.c.b16 %v191, %v190
      %v213 = vpack.c.b16 %v193, %v192
      %v214 = vpack.c.b16 %v195, %v194
      %v215 = vpack.c.b16 %v197, %v196
      %v216 = vpack.c.b16 %v199, %v198
      %v217 = vpack.c.b16 %v201, %v200
      %v250 = vunpack.c.l.b16 %v118
      %v251 = vunpack.c.l.b16 %v119
      %v252 = vunpack.c.l.b16 %v120
      %v253 = vunpack.c.l.b16 %v121
      %v254 = vunpack.c.l.b16 %v122
      %v255 = vunpack.c.l.b16 %v123
      %v256 = vunpack.c.l.b16 %v124
      %v257 = vunpack.c.l.b16 %v125
      %v258 = vunpack.c.l.b16 %v126
      %v259 = vunpack.c.l.b16 %v127
      %v260 = vunpack.c.l.b16 %v128
      %v261 = vunpack.c.l.b16 %v129
      %v262 = vunpack.c.l.b16 %v130
      %v263 = vunpack.c.l.b16 %v131
      %v264 = vunpack.c.l.b16 %v132
      %v265 = vunpack.c.l.b16 %v133
      %v266 = vpack.c.b16 %v251, %v250
      %v267 = vpack.c.b16 %v253, %v252
      %v268 = vpack.c.b16 %v255, %v254
      %v269 = vpack.c.b16 %v257, %v256
      %v270 = vpack.c.b16 %v259, %v258
      %v271 = vpack.c.b16 %v261, %v260
      %v272 = vpack.c.b16 %v263, %v262
      %v273 = vpack.c.b16 %v265, %v264
      %282 = vmatpush.bf16.msra.mxu0 %v273
      %283 = vmatpush.bf16.msra.mxu0 %v272
      %284 = vmatpush.bf16.msra.mxu0 %v271
      %285 = vmatpush.bf16.msra.mxu0 %v270
      %286 = vmatpush.bf16.msra.mxu0 %v269
      %287 = vmatpush.bf16.msra.mxu0 %v268
      %288 = vmatpush.bf16.msra.mxu0 %v267
      %289 = vmatpush.bf16.msra.mxu0 %v266
      %290 = vmatmul.bf16.gmra.mxu0 %v202
      %v291 = vpop.f32.mrf.mxu0
      %v292 = vadd.f32 %v136, %v291
      %v293 = vpop.f32.mrf.mxu0
      %v294 = vadd.f32 %v136, %v293
      %295 = vmatmul.bf16.gmra.mxu0 %v203
      %v296 = vpop.f32.mrf.mxu0
      %v297 = vadd.f32 %v136, %v296
      %v298 = vpop.f32.mrf.mxu0
      %v299 = vadd.f32 %v136, %v298
      %300 = vmatmul.bf16.gmra.mxu0 %v204
      %v301 = vpop.f32.mrf.mxu0
      %v302 = vadd.f32 %v136, %v301
      %v303 = vpop.f32.mrf.mxu0
      %v304 = vadd.f32 %v136, %v303
      %305 = vmatmul.bf16.gmra.mxu0 %v205
      %v306 = vpop.f32.mrf.mxu0
      %v307 = vadd.f32 %v136, %v306
      %v308 = vpop.f32.mrf.mxu0
      %v309 = vadd.f32 %v136, %v308
      %310 = vmatmul.bf16.gmra.mxu0 %v206
      %v311 = vpop.f32.mrf.mxu0
      %v312 = vadd.f32 %v136, %v311
      %v313 = vpop.f32.mrf.mxu0
      %v314 = vadd.f32 %v136, %v313
      %315 = vmatmul.bf16.gmra.mxu0 %v207
      %v316 = vpop.f32.mrf.mxu0
      %v317 = vadd.f32 %v136, %v316
      %v318 = vpop.f32.mrf.mxu0
      %v319 = vadd.f32 %v136, %v318
      %320 = vmatmul.bf16.gmra.mxu0 %v208
      %v321 = vpop.f32.mrf.mxu0
      %v322 = vadd.f32 %v136, %v321
      %v323 = vpop.f32.mrf.mxu0
      %v324 = vadd.f32 %v136, %v323
      %325 = vmatmul.bf16.gmra.mxu0 %v209
      %v326 = vpop.f32.mrf.mxu0
      %v327 = vadd.f32 %v136, %v326
      %v328 = vpop.f32.mrf.mxu0
      %v329 = vadd.f32 %v136, %v328
      %330 = vmatmul.bf16.gmra.mxu0 %v210
      %v331 = vpop.f32.mrf.mxu0
      %v332 = vadd.f32 %v136, %v331
      %v333 = vpop.f32.mrf.mxu0
      %v334 = vadd.f32 %v136, %v333
      %335 = vmatmul.bf16.gmra.mxu0 %v211
      %v336 = vpop.f32.mrf.mxu0
      %v337 = vadd.f32 %v136, %v336
      %v338 = vpop.f32.mrf.mxu0
      %v339 = vadd.f32 %v136, %v338
      %340 = vmatmul.bf16.gmra.mxu0 %v212
      %v341 = vpop.f32.mrf.mxu0
      %v342 = vadd.f32 %v136, %v341
      %v343 = vpop.f32.mrf.mxu0
      %v344 = vadd.f32 %v136, %v343
      %345 = vmatmul.bf16.gmra.mxu0 %v213
      %v346 = vpop.f32.mrf.mxu0
      %v347 = vadd.f32 %v136, %v346
      %v348 = vpop.f32.mrf.mxu0
      %v349 = vadd.f32 %v136, %v348
      %350 = vmatmul.bf16.gmra.mxu0 %v214
      %v351 = vpop.f32.mrf.mxu0
      %v352 = vadd.f32 %v136, %v351
      %v353 = vpop.f32.mrf.mxu0
      %v354 = vadd.f32 %v136, %v353
      %355 = vmatmul.bf16.gmra.mxu0 %v215
      %v356 = vpop.f32.mrf.mxu0
      %v357 = vadd.f32 %v136, %v356
      %v358 = vpop.f32.mrf.mxu0
      %v359 = vadd.f32 %v136, %v358
      %360 = vmatmul.bf16.gmra.mxu0 %v216
      %v361 = vpop.f32.mrf.mxu0
      %v362 = vadd.f32 %v136, %v361
      %v363 = vpop.f32.mrf.mxu0
      %v364 = vadd.f32 %v136, %v363
      %365 = vmatmul.bf16.gmra.mxu0 %v217
      %v366 = vpop.f32.mrf.mxu0
      %v367 = vadd.f32 %v136, %v366
      %v368 = vpop.f32.mrf.mxu0
      %v369 = vadd.f32 %v136, %v368
      %370 = vdwg.mxu0
      %v371 = vmax.f32 %v292, 0.0
      %v372 = vmax.f32 %v294, 0.0
      %v373 = vmax.f32 %v297, 0.0
      %v374 = vmax.f32 %v299, 0.0
      %v375 = vmax.f32 %v302, 0.0
      %v376 = vmax.f32 %v304, 0.0
      %v377 = vmax.f32 %v307, 0.0
      %v378 = vmax.f32 %v309, 0.0
      %v379 = vmax.f32 %v312, 0.0
      %v380 = vmax.f32 %v314, 0.0
      %v381 = vmax.f32 %v317, 0.0
      %v382 = vmax.f32 %v319, 0.0
      %v383 = vmax.f32 %v322, 0.0
      %v384 = vmax.f32 %v324, 0.0
      %v385 = vmax.f32 %v327, 0.0
      %v386 = vmax.f32 %v329, 0.0
      %v387 = vmax.f32 %v332, 0.0
      %v388 = vmax.f32 %v334, 0.0
      %v389 = vmax.f32 %v337, 0.0
      %v390 = vmax.f32 %v339, 0.0
      %v391 = vmax.f32 %v342, 0.0
      %v392 = vmax.f32 %v344, 0.0
      %v393 = vmax.f32 %v347, 0.0
      %v394 = vmax.f32 %v349, 0.0
      %v395 = vmax.f32 %v352, 0.0
      %v396 = vmax.f32 %v354, 0.0
      %v397 = vmax.f32 %v357, 0.0
      %v398 = vmax.f32 %v359, 0.0
      %v399 = vmax.f32 %v362, 0.0
      %v400 = vmax.f32 %v364, 0.0
      %v401 = vmax.f32 %v367, 0.0
      %v402 = vmax.f32 %v369, 0.0
      %v403 = vpack.c.bf16 %v371, %v371
      %v404 = vpack.c.bf16 %v372, %v372
      %v405 = vpack.c.bf16 %v373, %v373
      %v406 = vpack.c.bf16 %v374, %v374
      %v407 = vpack.c.bf16 %v375, %v375
      %v408 = vpack.c.bf16 %v376, %v376
      %v409 = vpack.c.bf16 %v377, %v377
      %v410 = vpack.c.bf16 %v378, %v378
      %v411 = vpack.c.bf16 %v379, %v379
      %v412 = vpack.c.bf16 %v380, %v380
      %v413 = vpack.c.bf16 %v381, %v381
      %v414 = vpack.c.bf16 %v382, %v382
      %v415 = vpack.c.bf16 %v383, %v383
      %v416 = vpack.c.bf16 %v384, %v384
      %v417 = vpack.c.bf16 %v385, %v385
      %v418 = vpack.c.bf16 %v386, %v386
      %v419 = vpack.c.bf16 %v387, %v387
      %v420 = vpack.c.bf16 %v388, %v388
      %v421 = vpack.c.bf16 %v389, %v389
      %v422 = vpack.c.bf16 %v390, %v390
      %v423 = vpack.c.bf16 %v391, %v391
      %v424 = vpack.c.bf16 %v392, %v392
      %v425 = vpack.c.bf16 %v393, %v393
      %v426 = vpack.c.bf16 %v394, %v394
      %v427 = vpack.c.bf16 %v395, %v395
      %v428 = vpack.c.bf16 %v396, %v396
      %v429 = vpack.c.bf16 %v397, %v397
      %v430 = vpack.c.bf16 %v398, %v398
      %v431 = vpack.c.bf16 %v399, %v399
      %v432 = vpack.c.bf16 %v400, %v400
      %v433 = vpack.c.bf16 %v401, %v401
      %v434 = vpack.c.bf16 %v402, %v402
      %435 = vst [vmem:[#allocation2] sm:$0xf] %v403
      %436 = vst [vmem:[#allocation2 + $0x4] sm:$0xf] %v404
      %437 = vst [vmem:[#allocation2 + $0x8] sm:$0xf] %v405
      %438 = vst [vmem:[#allocation2 + $0xc] sm:$0xf] %v406
      %439 = vst [vmem:[#allocation2 + $0x10] sm:$0xf] %v407
      %440 = vst [vmem:[#allocation2 + $0x14] sm:$0xf] %v408
      %441 = vst [vmem:[#allocation2 + $0x18] sm:$0xf] %v409
      %442 = vst [vmem:[#allocation2 + $0x1c] sm:$0xf] %v410
      %443 = vst [vmem:[#allocation2 + $0x20] sm:$0xf] %v411
      %444 = vst [vmem:[#allocation2 + $0x24] sm:$0xf] %v412
      %445 = vst [vmem:[#allocation2 + $0x28] sm:$0xf] %v413
      %446 = vst [vmem:[#allocation2 + $0x2c] sm:$0xf] %v414
      %447 = vst [vmem:[#allocation2 + $0x30] sm:$0xf] %v415
      %448 = vst [vmem:[#allocation2 + $0x34] sm:$0xf] %v416
      %449 = vst [vmem:[#allocation2 + $0x38] sm:$0xf] %v417
      %450 = vst [vmem:[#allocation2 + $0x3c] sm:$0xf] %v418
      %451 = vst [vmem:[#allocation2 + $0x40] sm:$0xf] %v419
      %452 = vst [vmem:[#allocation2 + $0x44] sm:$0xf] %v420
      %453 = vst [vmem:[#allocation2 + $0x48] sm:$0xf] %v421
      %454 = vst [vmem:[#allocation2 + $0x4c] sm:$0xf] %v422
      %455 = vst [vmem:[#allocation2 + $0x50] sm:$0xf] %v423
      %456 = vst [vmem:[#allocation2 + $0x54] sm:$0xf] %v424
      %457 = vst [vmem:[#allocation2 + $0x58] sm:$0xf] %v425
      %458 = vst [vmem:[#allocation2 + $0x5c] sm:$0xf] %v426
      %459 = vst [vmem:[#allocation2 + $0x60] sm:$0xf] %v427
      %460 = vst [vmem:[#allocation2 + $0x64] sm:$0xf] %v428
      %461 = vst [vmem:[#allocation2 + $0x68] sm:$0xf] %v429
      %462 = vst [vmem:[#allocation2 + $0x6c] sm:$0xf] %v430
      %463 = vst [vmem:[#allocation2 + $0x70] sm:$0xf] %v431
      %464 = vst [vmem:[#allocation2 + $0x74] sm:$0xf] %v432
      %465 = vst [vmem:[#allocation2 + $0x78] sm:$0xf] %v433
      %466 = vst [vmem:[#allocation2 + $0x7c] sm:$0xf] %v434
    $region41: #{tpu_custom_call.1} parent=1 // pred_fallthru
      _
    %v467 = vld [vmem:[#allocation2] sm:$0xf]
    %v468 = vld [vmem:[#allocation2 + $0x4] sm:$0xf]
    %v469 = vld [vmem:[#allocation2 + $0x8] sm:$0xf]
    %v470 = vld [vmem:[#allocation2 + $0xc] sm:$0xf]
    %v471 = vld [vmem:[#allocation2 + $0x10] sm:$0xf]
    %v472 = vld [vmem:[#allocation2 + $0x14] sm:$0xf]
    %v473 = vld [vmem:[#allocation2 + $0x18] sm:$0xf]
    %v474 = vld [vmem:[#allocation2 + $0x1c] sm:$0xf]
    %v475 = vld [vmem:[#allocation2 + $0x20] sm:$0xf]
    %v476 = vld [vmem:[#allocation2 + $0x24] sm:$0xf]
    %v477 = vld [vmem:[#allocation2 + $0x28] sm:$0xf]
    %v478 = vld [vmem:[#allocation2 + $0x2c] sm:$0xf]
    %v479 = vld [vmem:[#allocation2 + $0x30] sm:$0xf]
    %v480 = vld [vmem:[#allocation2 + $0x34] sm:$0xf]
    %v481 = vld [vmem:[#allocation2 + $0x38] sm:$0xf]
    %v482 = vld [vmem:[#allocation2 + $0x3c] sm:$0xf]
    %v483 = vld [vmem:[#allocation2 + $0x40] sm:$0xf]
    %v484 = vld [vmem:[#allocation2 + $0x44] sm:$0xf]
    %v485 = vld [vmem:[#allocation2 + $0x48] sm:$0xf]
    %v486 = vld [vmem:[#allocation2 + $0x4c] sm:$0xf]
    %v487 = vld [vmem:[#allocation2 + $0x50] sm:$0xf]
    %v488 = vld [vmem:[#allocation2 + $0x54] sm:$0xf]
    %v489 = vld [vmem:[#allocation2 + $0x58] sm:$0xf]
    %v490 = vld [vmem:[#allocation2 + $0x5c] sm:$0xf]
    %v491 = vld [vmem:[#allocation2 + $0x60] sm:$0xf]
    %v492 = vld [vmem:[#allocation2 + $0x64] sm:$0xf]
    %v493 = vld [vmem:[#allocation2 + $0x68] sm:$0xf]
    %v494 = vld [vmem:[#allocation2 + $0x6c] sm:$0xf]
    %v495 = vld [vmem:[#allocation2 + $0x70] sm:$0xf]
    %v496 = vld [vmem:[#allocation2 + $0x74] sm:$0xf]
    %v497 = vld [vmem:[#allocation2 + $0x78] sm:$0xf]
    %v498 = vld [vmem:[#allocation2 + $0x7c] sm:$0xf]
    %v499 = vld [vmem:[#allocation8] sm:$0xff]
    %v500 = vld [vmem:[#allocation8 + $0x8] sm:$0xff]
    %v501 = vld [vmem:[#allocation8 + $0x10] sm:$0xff]
    %v502 = vld [vmem:[#allocation8 + $0x18] sm:$0xf]
    %v503 = vld [vmem:[#allocation8 + $0x1c] sm:$0xff]
    %v504 = vld [vmem:[#allocation8 + $0x24] sm:$0xff]
    %v505 = vld [vmem:[#allocation8 + $0x2c] sm:$0xff]
    %v506 = vld [vmem:[#allocation8 + $0x34] sm:$0xf]
    %v507 = vld [vmem:[#allocation8 + $0x38] sm:$0xff]
    %v508 = vld [vmem:[#allocation8 + $0x40] sm:$0xff]
    %v509 = vld [vmem:[#allocation8 + $0x48] sm:$0xff]
    %v510 = vld [vmem:[#allocation8 + $0x50] sm:$0xf]
    %v511 = vld [vmem:[#allocation8 + $0x54] sm:$0xff]
    %v512 = vld [vmem:[#allocation8 + $0x5c] sm:$0xff]
    %v513 = vld [vmem:[#allocation8 + $0x64] sm:$0xff]
    %v514 = vld [vmem:[#allocation8 + $0x6c] sm:$0xf]
    %v515 = vld [vmem:[#allocation8 + $0x70] sm:$0xff]
    %v516 = vld [vmem:[#allocation8 + $0x78] sm:$0xff]
    %v517 = vld [vmem:[#allocation8 + $0x80] sm:$0xff]
    %v518 = vld [vmem:[#allocation8 + $0x88] sm:$0xf]
    %v519 = vld [vmem:[#allocation8 + $0x8c] sm:$0xff]
    %v520 = vld [vmem:[#allocation8 + $0x94] sm:$0xff]
    %v521 = vld [vmem:[#allocation8 + $0x9c] sm:$0xff]
    %v522 = vld [vmem:[#allocation8 + $0xa4] sm:$0xf]
    %v523 = vld [vmem:[#allocation8 + $0xa8] sm:$0xff]
    %v524 = vld [vmem:[#allocation8 + $0xb0] sm:$0xff]
    %v525 = vld [vmem:[#allocation8 + $0xb8] sm:$0xff]
    %v526 = vld [vmem:[#allocation8 + $0xc0] sm:$0xf]
    %v527 = vld [vmem:[#allocation8 + $0xc4] sm:$0xff]
    %v528 = vld [vmem:[#allocation8 + $0xcc] sm:$0xff]
    %v529 = vld [vmem:[#allocation8 + $0xd4] sm:$0xff]
    %v530 = vld [vmem:[#allocation8 + $0xdc] sm:$0xf]
    %v531 = vld [vmem:[#allocation8 + $0xe0] sm:$0xff]
    %v532 = vld [vmem:[#allocation8 + $0xe8] sm:$0xff]
    %v533 = vld [vmem:[#allocation8 + $0xf0] sm:$0xff]
    %v534 = vld [vmem:[#allocation8 + $0xf8] sm:$0xf]
    %v535 = vld [vmem:[#allocation8 + $0xfc] sm:$0xff]
    %v536 = vld [vmem:[#allocation8 + $0x104] sm:$0xff]
    %v537 = vld [vmem:[#allocation8 + $0x10c] sm:$0xff]
    %v538 = vld [vmem:[#allocation8 + $0x114] sm:$0xf]
    %v539 = vld [vmem:[#allocation8 + $0x118] sm:$0xff]
    %v540 = vld [vmem:[#allocation8 + $0x120] sm:$0xff]
    %v541 = vld [vmem:[#allocation8 + $0x128] sm:$0xff]
    %v542 = vld [vmem:[#allocation8 + $0x130] sm:$0xf]
    %v543 = vld [vmem:[#allocation8 + $0x134] sm:$0xff]
    %v544 = vld [vmem:[#allocation8 + $0x13c] sm:$0xff]
    %v545 = vld [vmem:[#allocation8 + $0x144] sm:$0xff]
    %v546 = vld [vmem:[#allocation8 + $0x14c] sm:$0xf]
    %v547 = vld [vmem:[#allocation8 + $0x150] sm:$0xff]
    %v548 = vld [vmem:[#allocation8 + $0x158] sm:$0xff]
    %v549 = vld [vmem:[#allocation8 + $0x160] sm:$0xff]
    %v550 = vld [vmem:[#allocation8 + $0x168] sm:$0xf]
    %v551 = vld [vmem:[#allocation8 + $0x16c] sm:$0xff]
    %v552 = vld [vmem:[#allocation8 + $0x174] sm:$0xff]
    %v553 = vld [vmem:[#allocation8 + $0x17c] sm:$0xff]
    %v554 = vld [vmem:[#allocation8 + $0x184] sm:$0xf]
    %v555 = vld [vmem:[#allocation8 + $0x188] sm:$0xff]
    %v556 = vld [vmem:[#allocation8 + $0x190] sm:$0xff]
    %v557 = vld [vmem:[#allocation8 + $0x198] sm:$0xff]
    %v558 = vld [vmem:[#allocation8 + $0x1a0] sm:$0xf]
    %v559 = vld [vmem:[#allocation8 + $0x1a4] sm:$0xff]
    %v560 = vld [vmem:[#allocation8 + $0x1ac] sm:$0xff]
    %v561 = vld [vmem:[#allocation8 + $0x1b4] sm:$0xff]
    %v562 = vld [vmem:[#allocation8 + $0x1bc] sm:$0xf]
    %v563 = vld [vmem:[#allocation9] sm:$0xff]
    %v565 = vperm.slane %v563, 0
    %v566 = vperm.slane %v563, 1
    %v567 = vperm.slane %v563, 2
    %v568 = vperm.slane %v563, 3
    %v569 = vperm.slane %v563, 4
    %v570 = vperm.slane %v563, 5
    %v571 = vperm.slane %v563, 6
    %v611 = vunpack.c.l.b16 %v467
    %v612 = vunpack.c.l.b16 %v468
    %v613 = vunpack.c.l.b16 %v469
    %v614 = vunpack.c.l.b16 %v470
    %v615 = vunpack.c.l.b16 %v471
    %v616 = vunpack.c.l.b16 %v472
    %v617 = vunpack.c.l.b16 %v473
    %v618 = vunpack.c.l.b16 %v474
    %v619 = vunpack.c.l.b16 %v475
    %v620 = vunpack.c.l.b16 %v476
    %v621 = vunpack.c.l.b16 %v477
    %v622 = vunpack.c.l.b16 %v478
    %v623 = vunpack.c.l.b16 %v479
    %v624 = vunpack.c.l.b16 %v480
    %v625 = vunpack.c.l.b16 %v481
    %v626 = vunpack.c.l.b16 %v482
    %v627 = vunpack.c.l.b16 %v483
    %v628 = vunpack.c.l.b16 %v484
    %v629 = vunpack.c.l.b16 %v485
    %v630 = vunpack.c.l.b16 %v486
    %v631 = vunpack.c.l.b16 %v487
    %v632 = vunpack.c.l.b16 %v488
    %v633 = vunpack.c.l.b16 %v489
    %v634 = vunpack.c.l.b16 %v490
    %v635 = vunpack.c.l.b16 %v491
    %v636 = vunpack.c.l.b16 %v492
    %v637 = vunpack.c.l.b16 %v493
    %v638 = vunpack.c.l.b16 %v494
    %v639 = vunpack.c.l.b16 %v495
    %v640 = vunpack.c.l.b16 %v496
    %v641 = vunpack.c.l.b16 %v497
    %v642 = vunpack.c.l.b16 %v498
    %v643 = vpack.c.b16 %v612, %v611
    %v644 = vpack.c.b16 %v614, %v613
    %v645 = vpack.c.b16 %v616, %v615
    %v646 = vpack.c.b16 %v618, %v617
    %v647 = vpack.c.b16 %v620, %v619
    %v648 = vpack.c.b16 %v622, %v621
    %v649 = vpack.c.b16 %v624, %v623
    %v650 = vpack.c.b16 %v626, %v625
    %v651 = vpack.c.b16 %v628, %v627
    %v652 = vpack.c.b16 %v630, %v629
    %v653 = vpack.c.b16 %v632, %v631
    %v654 = vpack.c.b16 %v634, %v633
    %v655 = vpack.c.b16 %v636, %v635
    %v656 = vpack.c.b16 %v638, %v637
    %v657 = vpack.c.b16 %v640, %v639
    %v658 = vpack.c.b16 %v642, %v641
    %v739 = vunpack.c.l.b16 %v499
    %v740 = vunpack.c.h.b16 %v499
    %v741 = vunpack.c.l.b16 %v500
    %v742 = vunpack.c.h.b16 %v500
    %v743 = vunpack.c.l.b16 %v501
    %v744 = vunpack.c.h.b16 %v501
    %v745 = vunpack.c.l.b16 %v502
    %v746 = vunpack.c.l.b16 %v503
    %v747 = vunpack.c.h.b16 %v503
    %v748 = vunpack.c.l.b16 %v504
    %v749 = vunpack.c.h.b16 %v504
    %v750 = vunpack.c.l.b16 %v505
    %v751 = vunpack.c.h.b16 %v505
    %v752 = vunpack.c.l.b16 %v506
    %v753 = vunpack.c.l.b16 %v507
    %v754 = vunpack.c.h.b16 %v507
    %v755 = vunpack.c.l.b16 %v508
    %v756 = vunpack.c.h.b16 %v508
    %v757 = vunpack.c.l.b16 %v509
    %v758 = vunpack.c.h.b16 %v509
    %v759 = vunpack.c.l.b16 %v510
    %v760 = vunpack.c.l.b16 %v511
    %v761 = vunpack.c.h.b16 %v511
    %v762 = vunpack.c.l.b16 %v512
    %v763 = vunpack.c.h.b16 %v512
    %v764 = vunpack.c.l.b16 %v513
    %v765 = vunpack.c.h.b16 %v513
    %v766 = vunpack.c.l.b16 %v514
    %v767 = vunpack.c.l.b16 %v515
    %v768 = vunpack.c.h.b16 %v515
    %v769 = vunpack.c.l.b16 %v516
    %v770 = vunpack.c.h.b16 %v516
    %v771 = vunpack.c.l.b16 %v517
    %v772 = vunpack.c.h.b16 %v517
    %v773 = vunpack.c.l.b16 %v518
    %v774 = vunpack.c.l.b16 %v519
    %v775 = vunpack.c.h.b16 %v519
    %v776 = vunpack.c.l.b16 %v520
    %v777 = vunpack.c.h.b16 %v520
    %v778 = vunpack.c.l.b16 %v521
    %v779 = vunpack.c.h.b16 %v521
    %v780 = vunpack.c.l.b16 %v522
    %v781 = vunpack.c.l.b16 %v523
    %v782 = vunpack.c.h.b16 %v523
    %v783 = vunpack.c.l.b16 %v524
    %v784 = vunpack.c.h.b16 %v524
    %v785 = vunpack.c.l.b16 %v525
    %v786 = vunpack.c.h.b16 %v525
    %v787 = vunpack.c.l.b16 %v526
    %v788 = vunpack.c.l.b16 %v527
    %v789 = vunpack.c.h.b16 %v527
    %v790 = vunpack.c.l.b16 %v528
    %v791 = vunpack.c.h.b16 %v528
    %v792 = vunpack.c.l.b16 %v529
    %v793 = vunpack.c.h.b16 %v529
    %v794 = vunpack.c.l.b16 %v530
    %v795 = vunpack.c.l.b16 %v531
    %v796 = vunpack.c.h.b16 %v531
    %v797 = vunpack.c.l.b16 %v532
    %v798 = vunpack.c.h.b16 %v532
    %v799 = vunpack.c.l.b16 %v533
    %v800 = vunpack.c.h.b16 %v533
    %v801 = vunpack.c.l.b16 %v534
    %v802 = vunpack.c.l.b16 %v535
    %v803 = vunpack.c.h.b16 %v535
    %v804 = vunpack.c.l.b16 %v536
    %v805 = vunpack.c.h.b16 %v536
    %v806 = vunpack.c.l.b16 %v537
    %v807 = vunpack.c.h.b16 %v537
    %v808 = vunpack.c.l.b16 %v538
    %v809 = vunpack.c.l.b16 %v539
    %v810 = vunpack.c.h.b16 %v539
    %v811 = vunpack.c.l.b16 %v540
    %v812 = vunpack.c.h.b16 %v540
    %v813 = vunpack.c.l.b16 %v541
    %v814 = vunpack.c.h.b16 %v541
    %v815 = vunpack.c.l.b16 %v542
    %v816 = vunpack.c.l.b16 %v543
    %v817 = vunpack.c.h.b16 %v543
    %v818 = vunpack.c.l.b16 %v544
    %v819 = vunpack.c.h.b16 %v544
    %v820 = vunpack.c.l.b16 %v545
    %v821 = vunpack.c.h.b16 %v545
    %v822 = vunpack.c.l.b16 %v546
    %v823 = vunpack.c.l.b16 %v547
    %v824 = vunpack.c.h.b16 %v547
    %v825 = vunpack.c.l.b16 %v548
    %v826 = vunpack.c.h.b16 %v548
    %v827 = vunpack.c.l.b16 %v549
    %v828 = vunpack.c.h.b16 %v549
    %v829 = vunpack.c.l.b16 %v550
    %v830 = vunpack.c.l.b16 %v551
    %v831 = vunpack.c.h.b16 %v551
    %v832 = vunpack.c.l.b16 %v552
    %v833 = vunpack.c.h.b16 %v552
    %v834 = vunpack.c.l.b16 %v553
    %v835 = vunpack.c.h.b16 %v553
    %v836 = vunpack.c.l.b16 %v554
    %v837 = vunpack.c.l.b16 %v555
    %v838 = vunpack.c.h.b16 %v555
    %v839 = vunpack.c.l.b16 %v556
    %v840 = vunpack.c.h.b16 %v556
    %v841 = vunpack.c.l.b16 %v557
    %v842 = vunpack.c.h.b16 %v557
    %v843 = vunpack.c.l.b16 %v558
    %v844 = vunpack.c.l.b16 %v559
    %v845 = vunpack.c.h.b16 %v559
    %v846 = vunpack.c.l.b16 %v560
    %v847 = vunpack.c.h.b16 %v560
    %v848 = vunpack.c.l.b16 %v561
    %v849 = vunpack.c.h.b16 %v561
    %v850 = vunpack.c.l.b16 %v562
    %v851 = vpack.c.b16 %v746, %v739
    %v852 = vpack.c.b16 %v747, %v740
    %v853 = vpack.c.b16 %v748, %v741
    %v854 = vpack.c.b16 %v749, %v742
    %v855 = vpack.c.b16 %v750, %v743
    %v856 = vpack.c.b16 %v751, %v744
    %v857 = vpack.c.b16 %v752, %v745
    %v858 = vpack.c.b16 %v760, %v753
    %v859 = vpack.c.b16 %v761, %v754
    %v860 = vpack.c.b16 %v762, %v755
    %v861 = vpack.c.b16 %v763, %v756
    %v862 = vpack.c.b16 %v764, %v757
    %v863 = vpack.c.b16 %v765, %v758
    %v864 = vpack.c.b16 %v766, %v759
    %v865 = vpack.c.b16 %v774, %v767
    %v866 = vpack.c.b16 %v775, %v768
    %v867 = vpack.c.b16 %v776, %v769
    %v868 = vpack.c.b16 %v777, %v770
    %v869 = vpack.c.b16 %v778, %v771
    %v870 = vpack.c.b16 %v779, %v772
    %v871 = vpack.c.b16 %v780, %v773
    %v872 = vpack.c.b16 %v788, %v781
    %v873 = vpack.c.b16 %v789, %v782
    %v874 = vpack.c.b16 %v790, %v783
    %v875 = vpack.c.b16 %v791, %v784
    %v876 = vpack.c.b16 %v792, %v785
    %v877 = vpack.c.b16 %v793, %v786
    %v878 = vpack.c.b16 %v794, %v787
    %v879 = vpack.c.b16 %v802, %v795
    %v880 = vpack.c.b16 %v803, %v796
    %v881 = vpack.c.b16 %v804, %v797
    %v882 = vpack.c.b16 %v805, %v798
    %v883 = vpack.c.b16 %v806, %v799
    %v884 = vpack.c.b16 %v807, %v800
    %v885 = vpack.c.b16 %v808, %v801
    %v886 = vpack.c.b16 %v816, %v809
    %v887 = vpack.c.b16 %v817, %v810
    %v888 = vpack.c.b16 %v818, %v811
    %v889 = vpack.c.b16 %v819, %v812
    %v890 = vpack.c.b16 %v820, %v813
    %v891 = vpack.c.b16 %v821, %v814
    %v892 = vpack.c.b16 %v822, %v815
    %v893 = vpack.c.b16 %v830, %v823
    %v894 = vpack.c.b16 %v831, %v824
    %v895 = vpack.c.b16 %v832, %v825
    %v896 = vpack.c.b16 %v833, %v826
    %v897 = vpack.c.b16 %v834, %v827
    %v898 = vpack.c.b16 %v835, %v828
    %v899 = vpack.c.b16 %v836, %v829
    %v900 = vpack.c.b16 %v844, %v837
    %v901 = vpack.c.b16 %v845, %v838
    %v902 = vpack.c.b16 %v846, %v839
    %v903 = vpack.c.b16 %v847, %v840
    %v904 = vpack.c.b16 %v848, %v841
    %v905 = vpack.c.b16 %v849, %v842
    %v906 = vpack.c.b16 %v850, %v843
    %963 = vmatpush.bf16.msra.mxu0 %v900
    %964 = vmatpush.bf16.msra.mxu0 %v893
    %965 = vmatpush.bf16.msra.mxu0 %v886
    %966 = vmatpush.bf16.msra.mxu0 %v879
    %967 = vmatpush.bf16.msra.mxu0 %v872
    %968 = vmatpush.bf16.msra.mxu0 %v865
    %969 = vmatpush.bf16.msra.mxu0 %v858
    %970 = vmatpush.bf16.msra.mxu0 %v851
    %971 = vmatmul.bf16.gmra.mxu0 %v643
    %v972 = vpop.f32.mrf.mxu0
    %v973 = vadd.f32 %v565, %v972
    %v974 = vpop.f32.mrf.mxu0
    %v975 = vadd.f32 %v565, %v974
    %976 = vmatmul.bf16.gmra.mxu0 %v644
    %v977 = vpop.f32.mrf.mxu0
    %v978 = vadd.f32 %v565, %v977
    %v979 = vpop.f32.mrf.mxu0
    %v980 = vadd.f32 %v565, %v979
    %981 = vmatmul.bf16.gmra.mxu0 %v645
    %v982 = vpop.f32.mrf.mxu0
    %v983 = vadd.f32 %v565, %v982
    %v984 = vpop.f32.mrf.mxu0
    %v985 = vadd.f32 %v565, %v984
    %986 = vmatmul.bf16.gmra.mxu0 %v646
    %v987 = vpop.f32.mrf.mxu0
    %v988 = vadd.f32 %v565, %v987
    %v989 = vpop.f32.mrf.mxu0
    %v990 = vadd.f32 %v565, %v989
    %991 = vmatmul.bf16.gmra.mxu0 %v647
    %v992 = vpop.f32.mrf.mxu0
    %v993 = vadd.f32 %v565, %v992
    %v994 = vpop.f32.mrf.mxu0
    %v995 = vadd.f32 %v565, %v994
    %996 = vmatmul.bf16.gmra.mxu0 %v648
    %v997 = vpop.f32.mrf.mxu0
    %v998 = vadd.f32 %v565, %v997
    %v999 = vpop.f32.mrf.mxu0
    %v1000 = vadd.f32 %v565, %v999
    %1001 = vmatmul.bf16.gmra.mxu0 %v649
    %v1002 = vpop.f32.mrf.mxu0
    %v1003 = vadd.f32 %v565, %v1002
    %v1004 = vpop.f32.mrf.mxu0
    %v1005 = vadd.f32 %v565, %v1004
    %1006 = vmatmul.bf16.gmra.mxu0 %v650
    %v1007 = vpop.f32.mrf.mxu0
    %v1008 = vadd.f32 %v565, %v1007
    %v1009 = vpop.f32.mrf.mxu0
    %v1010 = vadd.f32 %v565, %v1009
    %1011 = vmatmul.bf16.gmra.mxu0 %v651
    %v1012 = vpop.f32.mrf.mxu0
    %v1013 = vadd.f32 %v565, %v1012
    %v1014 = vpop.f32.mrf.mxu0
    %v1015 = vadd.f32 %v565, %v1014
    %1016 = vmatmul.bf16.gmra.mxu0 %v652
    %v1017 = vpop.f32.mrf.mxu0
    %v1018 = vadd.f32 %v565, %v1017
    %v1019 = vpop.f32.mrf.mxu0
    %v1020 = vadd.f32 %v565, %v1019
    %1021 = vmatmul.bf16.gmra.mxu0 %v653
    %v1022 = vpop.f32.mrf.mxu0
    %v1023 = vadd.f32 %v565, %v1022
    %v1024 = vpop.f32.mrf.mxu0
    %v1025 = vadd.f32 %v565, %v1024
    %1026 = vmatmul.bf16.gmra.mxu0 %v654
    %v1027 = vpop.f32.mrf.mxu0
    %v1028 = vadd.f32 %v565, %v1027
    %v1029 = vpop.f32.mrf.mxu0
    %v1030 = vadd.f32 %v565, %v1029
    %1031 = vmatmul.bf16.gmra.mxu0 %v655
    %v1032 = vpop.f32.mrf.mxu0
    %v1033 = vadd.f32 %v565, %v1032
    %v1034 = vpop.f32.mrf.mxu0
    %v1035 = vadd.f32 %v565, %v1034
    %1036 = vmatmul.bf16.gmra.mxu0 %v656
    %v1037 = vpop.f32.mrf.mxu0
    %v1038 = vadd.f32 %v565, %v1037
    %v1039 = vpop.f32.mrf.mxu0
    %v1040 = vadd.f32 %v565, %v1039
    %1041 = vmatmul.bf16.gmra.mxu0 %v657
    %v1042 = vpop.f32.mrf.mxu0
    %v1043 = vadd.f32 %v565, %v1042
    %v1044 = vpop.f32.mrf.mxu0
    %v1045 = vadd.f32 %v565, %v1044
    %1046 = vmatmul.bf16.gmra.mxu0 %v658
    %v1047 = vpop.f32.mrf.mxu0
    %v1048 = vadd.f32 %v565, %v1047
    %v1049 = vpop.f32.mrf.mxu0
    %v1050 = vadd.f32 %v565, %v1049
    %1051 = vdwg.mxu0
    %1052 = vmatpush.bf16.msra.mxu0 %v901
    %1053 = vmatpush.bf16.msra.mxu0 %v894
    %1054 = vmatpush.bf16.msra.mxu0 %v887
    %1055 = vmatpush.bf16.msra.mxu0 %v880
    %1056 = vmatpush.bf16.msra.mxu0 %v873
    %1057 = vmatpush.bf16.msra.mxu0 %v866
    %1058 = vmatpush.bf16.msra.mxu0 %v859
    %1059 = vmatpush.bf16.msra.mxu0 %v852
    %1060 = vmatmul.bf16.gmra.mxu0 %v643
    %v1061 = vpop.f32.mrf.mxu0
    %v1062 = vadd.f32 %v566, %v1061
    %v1063 = vpop.f32.mrf.mxu0
    %v1064 = vadd.f32 %v566, %v1063
    %1065 = vmatmul.bf16.gmra.mxu0 %v644
    %v1066 = vpop.f32.mrf.mxu0
    %v1067 = vadd.f32 %v566, %v1066
    %v1068 = vpop.f32.mrf.mxu0
    %v1069 = vadd.f32 %v566, %v1068
    %1070 = vmatmul.bf16.gmra.mxu0 %v645
    %v1071 = vpop.f32.mrf.mxu0
    %v1072 = vadd.f32 %v566, %v1071
    %v1073 = vpop.f32.mrf.mxu0
    %v1074 = vadd.f32 %v566, %v1073
    %1075 = vmatmul.bf16.gmra.mxu0 %v646
    %v1076 = vpop.f32.mrf.mxu0
    %v1077 = vadd.f32 %v566, %v1076
    %v1078 = vpop.f32.mrf.mxu0
    %v1079 = vadd.f32 %v566, %v1078
    %1080 = vmatmul.bf16.gmra.mxu0 %v647
    %v1081 = vpop.f32.mrf.mxu0
    %v1082 = vadd.f32 %v566, %v1081
    %v1083 = vpop.f32.mrf.mxu0
    %v1084 = vadd.f32 %v566, %v1083
    %1085 = vmatmul.bf16.gmra.mxu0 %v648
    %v1086 = vpop.f32.mrf.mxu0
    %v1087 = vadd.f32 %v566, %v1086
    %v1088 = vpop.f32.mrf.mxu0
    %v1089 = vadd.f32 %v566, %v1088
    %1090 = vmatmul.bf16.gmra.mxu0 %v649
    %v1091 = vpop.f32.mrf.mxu0
    %v1092 = vadd.f32 %v566, %v1091
    %v1093 = vpop.f32.mrf.mxu0
    %v1094 = vadd.f32 %v566, %v1093
    %1095 = vmatmul.bf16.gmra.mxu0 %v650
    %v1096 = vpop.f32.mrf.mxu0
    %v1097 = vadd.f32 %v566, %v1096
    %v1098 = vpop.f32.mrf.mxu0
    %v1099 = vadd.f32 %v566, %v1098
    %1100 = vmatmul.bf16.gmra.mxu0 %v651
    %v1101 = vpop.f32.mrf.mxu0
    %v1102 = vadd.f32 %v566, %v1101
    %v1103 = vpop.f32.mrf.mxu0
    %v1104 = vadd.f32 %v566, %v1103
    %1105 = vmatmul.bf16.gmra.mxu0 %v652
    %v1106 = vpop.f32.mrf.mxu0
    %v1107 = vadd.f32 %v566, %v1106
    %v1108 = vpop.f32.mrf.mxu0
    %v1109 = vadd.f32 %v566, %v1108
    %1110 = vmatmul.bf16.gmra.mxu0 %v653
    %v1111 = vpop.f32.mrf.mxu0
    %v1112 = vadd.f32 %v566, %v1111
    %v1113 = vpop.f32.mrf.mxu0
    %v1114 = vadd.f32 %v566, %v1113
    %1115 = vmatmul.bf16.gmra.mxu0 %v654
    %v1116 = vpop.f32.mrf.mxu0
    %v1117 = vadd.f32 %v566, %v1116
    %v1118 = vpop.f32.mrf.mxu0
    %v1119 = vadd.f32 %v566, %v1118
    %1120 = vmatmul.bf16.gmra.mxu0 %v655
    %v1121 = vpop.f32.mrf.mxu0
    %v1122 = vadd.f32 %v566, %v1121
    %v1123 = vpop.f32.mrf.mxu0
    %v1124 = vadd.f32 %v566, %v1123
    %1125 = vmatmul.bf16.gmra.mxu0 %v656
    %v1126 = vpop.f32.mrf.mxu0
    %v1127 = vadd.f32 %v566, %v1126
    %v1128 = vpop.f32.mrf.mxu0
    %v1129 = vadd.f32 %v566, %v1128
    %1130 = vmatmul.bf16.gmra.mxu0 %v657
    %v1131 = vpop.f32.mrf.mxu0
    %v1132 = vadd.f32 %v566, %v1131
    %v1133 = vpop.f32.mrf.mxu0
    %v1134 = vadd.f32 %v566, %v1133
    %1135 = vmatmul.bf16.gmra.mxu0 %v658
    %v1136 = vpop.f32.mrf.mxu0
    %v1137 = vadd.f32 %v566, %v1136
    %v1138 = vpop.f32.mrf.mxu0
    %v1139 = vadd.f32 %v566, %v1138
    %1140 = vdwg.mxu0
    %1141 = vmatpush.bf16.msra.mxu0 %v902
    %1142 = vmatpush.bf16.msra.mxu0 %v895
    %1143 = vmatpush.bf16.msra.mxu0 %v888
    %1144 = vmatpush.bf16.msra.mxu0 %v881
    %1145 = vmatpush.bf16.msra.mxu0 %v874
    %1146 = vmatpush.bf16.msra.mxu0 %v867
    %1147 = vmatpush.bf16.msra.mxu0 %v860
    %1148 = vmatpush.bf16.msra.mxu0 %v853
    %1149 = vmatmul.bf16.gmra.mxu0 %v643
    %v1150 = vpop.f32.mrf.mxu0
    %v1151 = vadd.f32 %v567, %v1150
    %v1152 = vpop.f32.mrf.mxu0
    %v1153 = vadd.f32 %v567, %v1152
    %1154 = vmatmul.bf16.gmra.mxu0 %v644
    %v1155 = vpop.f32.mrf.mxu0
    %v1156 = vadd.f32 %v567, %v1155
    %v1157 = vpop.f32.mrf.mxu0
    %v1158 = vadd.f32 %v567, %v1157
    %1159 = vmatmul.bf16.gmra.mxu0 %v645
    %v1160 = vpop.f32.mrf.mxu0
    %v1161 = vadd.f32 %v567, %v1160
    %v1162 = vpop.f32.mrf.mxu0
    %v1163 = vadd.f32 %v567, %v1162
    %1164 = vmatmul.bf16.gmra.mxu0 %v646
    %v1165 = vpop.f32.mrf.mxu0
    %v1166 = vadd.f32 %v567, %v1165
    %v1167 = vpop.f32.mrf.mxu0
    %v1168 = vadd.f32 %v567, %v1167
    %1169 = vmatmul.bf16.gmra.mxu0 %v647
    %v1170 = vpop.f32.mrf.mxu0
    %v1171 = vadd.f32 %v567, %v1170
    %v1172 = vpop.f32.mrf.mxu0
    %v1173 = vadd.f32 %v567, %v1172
    %1174 = vmatmul.bf16.gmra.mxu0 %v648
    %v1175 = vpop.f32.mrf.mxu0
    %v1176 = vadd.f32 %v567, %v1175
    %v1177 = vpop.f32.mrf.mxu0
    %v1178 = vadd.f32 %v567, %v1177
    %1179 = vmatmul.bf16.gmra.mxu0 %v649
    %v1180 = vpop.f32.mrf.mxu0
    %v1181 = vadd.f32 %v567, %v1180
    %v1182 = vpop.f32.mrf.mxu0
    %v1183 = vadd.f32 %v567, %v1182
    %1184 = vmatmul.bf16.gmra.mxu0 %v650
    %v1185 = vpop.f32.mrf.mxu0
    %v1186 = vadd.f32 %v567, %v1185
    %v1187 = vpop.f32.mrf.mxu0
    %v1188 = vadd.f32 %v567, %v1187
    %1189 = vmatmul.bf16.gmra.mxu0 %v651
    %v1190 = vpop.f32.mrf.mxu0
    %v1191 = vadd.f32 %v567, %v1190
    %v1192 = vpop.f32.mrf.mxu0
    %v1193 = vadd.f32 %v567, %v1192
    %1194 = vmatmul.bf16.gmra.mxu0 %v652
    %v1195 = vpop.f32.mrf.mxu0
    %v1196 = vadd.f32 %v567, %v1195
    %v1197 = vpop.f32.mrf.mxu0
    %v1198 = vadd.f32 %v567, %v1197
    %1199 = vmatmul.bf16.gmra.mxu0 %v653
    %v1200 = vpop.f32.mrf.mxu0
    %v1201 = vadd.f32 %v567, %v1200
    %v1202 = vpop.f32.mrf.mxu0
    %v1203 = vadd.f32 %v567, %v1202
    %1204 = vmatmul.bf16.gmra.mxu0 %v654
    %v1205 = vpop.f32.mrf.mxu0
    %v1206 = vadd.f32 %v567, %v1205
    %v1207 = vpop.f32.mrf.mxu0
    %v1208 = vadd.f32 %v567, %v1207
    %1209 = vmatmul.bf16.gmra.mxu0 %v655
    %v1210 = vpop.f32.mrf.mxu0
    %v1211 = vadd.f32 %v567, %v1210
    %v1212 = vpop.f32.mrf.mxu0
    %v1213 = vadd.f32 %v567, %v1212
    %1214 = vmatmul.bf16.gmra.mxu0 %v656
    %v1215 = vpop.f32.mrf.mxu0
    %v1216 = vadd.f32 %v567, %v1215
    %v1217 = vpop.f32.mrf.mxu0
    %v1218 = vadd.f32 %v567, %v1217
    %1219 = vmatmul.bf16.gmra.mxu0 %v657
    %v1220 = vpop.f32.mrf.mxu0
    %v1221 = vadd.f32 %v567, %v1220
    %v1222 = vpop.f32.mrf.mxu0
    %v1223 = vadd.f32 %v567, %v1222
    %1224 = vmatmul.bf16.gmra.mxu0 %v658
    %v1225 = vpop.f32.mrf.mxu0
    %v1226 = vadd.f32 %v567, %v1225
    %v1227 = vpop.f32.mrf.mxu0
    %v1228 = vadd.f32 %v567, %v1227
    %1229 = vdwg.mxu0
    %1230 = vmatpush.bf16.msra.mxu0 %v903
    %1231 = vmatpush.bf16.msra.mxu0 %v896
    %1232 = vmatpush.bf16.msra.mxu0 %v889
    %1233 = vmatpush.bf16.msra.mxu0 %v882
    %1234 = vmatpush.bf16.msra.mxu0 %v875
    %1235 = vmatpush.bf16.msra.mxu0 %v868
    %1236 = vmatpush.bf16.msra.mxu0 %v861
    %1237 = vmatpush.bf16.msra.mxu0 %v854
    %1238 = vmatmul.bf16.gmra.mxu0 %v643
    %v1239 = vpop.f32.mrf.mxu0
    %v1240 = vadd.f32 %v568, %v1239
    %v1241 = vpop.f32.mrf.mxu0
    %v1242 = vadd.f32 %v568, %v1241
    %1243 = vmatmul.bf16.gmra.mxu0 %v644
    %v1244 = vpop.f32.mrf.mxu0
    %v1245 = vadd.f32 %v568, %v1244
    %v1246 = vpop.f32.mrf.mxu0
    %v1247 = vadd.f32 %v568, %v1246
    %1248 = vmatmul.bf16.gmra.mxu0 %v645
    %v1249 = vpop.f32.mrf.mxu0
    %v1250 = vadd.f32 %v568, %v1249
    %v1251 = vpop.f32.mrf.mxu0
    %v1252 = vadd.f32 %v568, %v1251
    %1253 = vmatmul.bf16.gmra.mxu0 %v646
    %v1254 = vpop.f32.mrf.mxu0
    %v1255 = vadd.f32 %v568, %v1254
    %v1256 = vpop.f32.mrf.mxu0
    %v1257 = vadd.f32 %v568, %v1256
    %1258 = vmatmul.bf16.gmra.mxu0 %v647
    %v1259 = vpop.f32.mrf.mxu0
    %v1260 = vadd.f32 %v568, %v1259
    %v1261 = vpop.f32.mrf.mxu0
    %v1262 = vadd.f32 %v568, %v1261
    %1263 = vmatmul.bf16.gmra.mxu0 %v648
    %v1264 = vpop.f32.mrf.mxu0
    %v1265 = vadd.f32 %v568, %v1264
    %v1266 = vpop.f32.mrf.mxu0
    %v1267 = vadd.f32 %v568, %v1266
    %1268 = vmatmul.bf16.gmra.mxu0 %v649
    %v1269 = vpop.f32.mrf.mxu0
    %v1270 = vadd.f32 %v568, %v1269
    %v1271 = vpop.f32.mrf.mxu0
    %v1272 = vadd.f32 %v568, %v1271
    %1273 = vmatmul.bf16.gmra.mxu0 %v650
    %v1274 = vpop.f32.mrf.mxu0
    %v1275 = vadd.f32 %v568, %v1274
    %v1276 = vpop.f32.mrf.mxu0
    %v1277 = vadd.f32 %v568, %v1276
    %1278 = vmatmul.bf16.gmra.mxu0 %v651
    %v1279 = vpop.f32.mrf.mxu0
    %v1280 = vadd.f32 %v568, %v1279
    %v1281 = vpop.f32.mrf.mxu0
    %v1282 = vadd.f32 %v568, %v1281
    %1283 = vmatmul.bf16.gmra.mxu0 %v652
    %v1284 = vpop.f32.mrf.mxu0
    %v1285 = vadd.f32 %v568, %v1284
    %v1286 = vpop.f32.mrf.mxu0
    %v1287 = vadd.f32 %v568, %v1286
    %1288 = vmatmul.bf16.gmra.mxu0 %v653
    %v1289 = vpop.f32.mrf.mxu0
    %v1290 = vadd.f32 %v568, %v1289
    %v1291 = vpop.f32.mrf.mxu0
    %v1292 = vadd.f32 %v568, %v1291
    %1293 = vmatmul.bf16.gmra.mxu0 %v654
    %v1294 = vpop.f32.mrf.mxu0
    %v1295 = vadd.f32 %v568, %v1294
    %v1296 = vpop.f32.mrf.mxu0
    %v1297 = vadd.f32 %v568, %v1296
    %1298 = vmatmul.bf16.gmra.mxu0 %v655
    %v1299 = vpop.f32.mrf.mxu0
    %v1300 = vadd.f32 %v568, %v1299
    %v1301 = vpop.f32.mrf.mxu0
    %v1302 = vadd.f32 %v568, %v1301
    %1303 = vmatmul.bf16.gmra.mxu0 %v656
    %v1304 = vpop.f32.mrf.mxu0
    %v1305 = vadd.f32 %v568, %v1304
    %v1306 = vpop.f32.mrf.mxu0
    %v1307 = vadd.f32 %v568, %v1306
    %1308 = vmatmul.bf16.gmra.mxu0 %v657
    %v1309 = vpop.f32.mrf.mxu0
    %v1310 = vadd.f32 %v568, %v1309
    %v1311 = vpop.f32.mrf.mxu0
    %v1312 = vadd.f32 %v568, %v1311
    %1313 = vmatmul.bf16.gmra.mxu0 %v658
    %v1314 = vpop.f32.mrf.mxu0
    %v1315 = vadd.f32 %v568, %v1314
    %v1316 = vpop.f32.mrf.mxu0
    %v1317 = vadd.f32 %v568, %v1316
    %1318 = vdwg.mxu0
    %1319 = vmatpush.bf16.msra.mxu0 %v904
    %1320 = vmatpush.bf16.msra.mxu0 %v897
    %1321 = vmatpush.bf16.msra.mxu0 %v890
    %1322 = vmatpush.bf16.msra.mxu0 %v883
    %1323 = vmatpush.bf16.msra.mxu0 %v876
    %1324 = vmatpush.bf16.msra.mxu0 %v869
    %1325 = vmatpush.bf16.msra.mxu0 %v862
    %1326 = vmatpush.bf16.msra.mxu0 %v855
    %1327 = vmatmul.bf16.gmra.mxu0 %v643
    %v1328 = vpop.f32.mrf.mxu0
    %v1329 = vadd.f32 %v569, %v1328
    %v1330 = vpop.f32.mrf.mxu0
    %v1331 = vadd.f32 %v569, %v1330
    %1332 = vmatmul.bf16.gmra.mxu0 %v644
    %v1333 = vpop.f32.mrf.mxu0
    %v1334 = vadd.f32 %v569, %v1333
    %v1335 = vpop.f32.mrf.mxu0
    %v1336 = vadd.f32 %v569, %v1335
    %1337 = vmatmul.bf16.gmra.mxu0 %v645
    %v1338 = vpop.f32.mrf.mxu0
    %v1339 = vadd.f32 %v569, %v1338
    %v1340 = vpop.f32.mrf.mxu0
    %v1341 = vadd.f32 %v569, %v1340
    %1342 = vmatmul.bf16.gmra.mxu0 %v646
    %v1343 = vpop.f32.mrf.mxu0
    %v1344 = vadd.f32 %v569, %v1343
    %v1345 = vpop.f32.mrf.mxu0
    %v1346 = vadd.f32 %v569, %v1345
    %1347 = vmatmul.bf16.gmra.mxu0 %v647
    %v1348 = vpop.f32.mrf.mxu0
    %v1349 = vadd.f32 %v569, %v1348
    %v1350 = vpop.f32.mrf.mxu0
    %v1351 = vadd.f32 %v569, %v1350
    %1352 = vmatmul.bf16.gmra.mxu0 %v648
    %v1353 = vpop.f32.mrf.mxu0
    %v1354 = vadd.f32 %v569, %v1353
    %v1355 = vpop.f32.mrf.mxu0
    %v1356 = vadd.f32 %v569, %v1355
    %1357 = vmatmul.bf16.gmra.mxu0 %v649
    %v1358 = vpop.f32.mrf.mxu0
    %v1359 = vadd.f32 %v569, %v1358
    %v1360 = vpop.f32.mrf.mxu0
    %v1361 = vadd.f32 %v569, %v1360
    %1362 = vmatmul.bf16.gmra.mxu0 %v650
    %v1363 = vpop.f32.mrf.mxu0
    %v1364 = vadd.f32 %v569, %v1363
    %v1365 = vpop.f32.mrf.mxu0
    %v1366 = vadd.f32 %v569, %v1365
    %1367 = vmatmul.bf16.gmra.mxu0 %v651
    %v1368 = vpop.f32.mrf.mxu0
    %v1369 = vadd.f32 %v569, %v1368
    %v1370 = vpop.f32.mrf.mxu0
    %v1371 = vadd.f32 %v569, %v1370
    %1372 = vmatmul.bf16.gmra.mxu0 %v652
    %v1373 = vpop.f32.mrf.mxu0
    %v1374 = vadd.f32 %v569, %v1373
    %v1375 = vpop.f32.mrf.mxu0
    %v1376 = vadd.f32 %v569, %v1375
    %1377 = vmatmul.bf16.gmra.mxu0 %v653
    %v1378 = vpop.f32.mrf.mxu0
    %v1379 = vadd.f32 %v569, %v1378
    %v1380 = vpop.f32.mrf.mxu0
    %v1381 = vadd.f32 %v569, %v1380
    %1382 = vmatmul.bf16.gmra.mxu0 %v654
    %v1383 = vpop.f32.mrf.mxu0
    %v1384 = vadd.f32 %v569, %v1383
    %v1385 = vpop.f32.mrf.mxu0
    %v1386 = vadd.f32 %v569, %v1385
    %1387 = vmatmul.bf16.gmra.mxu0 %v655
    %v1388 = vpop.f32.mrf.mxu0
    %v1389 = vadd.f32 %v569, %v1388
    %v1390 = vpop.f32.mrf.mxu0
    %v1391 = vadd.f32 %v569, %v1390
    %1392 = vmatmul.bf16.gmra.mxu0 %v656
    %v1393 = vpop.f32.mrf.mxu0
    %v1394 = vadd.f32 %v569, %v1393
    %v1395 = vpop.f32.mrf.mxu0
    %v1396 = vadd.f32 %v569, %v1395
    %1397 = vmatmul.bf16.gmra.mxu0 %v657
    %v1398 = vpop.f32.mrf.mxu0
    %v1399 = vadd.f32 %v569, %v1398
    %v1400 = vpop.f32.mrf.mxu0
    %v1401 = vadd.f32 %v569, %v1400
    %1402 = vmatmul.bf16.gmra.mxu0 %v658
    %v1403 = vpop.f32.mrf.mxu0
    %v1404 = vadd.f32 %v569, %v1403
    %v1405 = vpop.f32.mrf.mxu0
    %v1406 = vadd.f32 %v569, %v1405
    %1407 = vdwg.mxu0
    %1408 = vmatpush.bf16.msra.mxu0 %v905
    %1409 = vmatpush.bf16.msra.mxu0 %v898
    %1410 = vmatpush.bf16.msra.mxu0 %v891
    %1411 = vmatpush.bf16.msra.mxu0 %v884
    %1412 = vmatpush.bf16.msra.mxu0 %v877
    %1413 = vmatpush.bf16.msra.mxu0 %v870
    %1414 = vmatpush.bf16.msra.mxu0 %v863
    %1415 = vmatpush.bf16.msra.mxu0 %v856
    %1416 = vmatmul.bf16.gmra.mxu0 %v643
    %v1417 = vpop.f32.mrf.mxu0
    %v1418 = vadd.f32 %v570, %v1417
    %v1419 = vpop.f32.mrf.mxu0
    %v1420 = vadd.f32 %v570, %v1419
    %1421 = vmatmul.bf16.gmra.mxu0 %v644
    %v1422 = vpop.f32.mrf.mxu0
    %v1423 = vadd.f32 %v570, %v1422
    %v1424 = vpop.f32.mrf.mxu0
    %v1425 = vadd.f32 %v570, %v1424
    %1426 = vmatmul.bf16.gmra.mxu0 %v645
    %v1427 = vpop.f32.mrf.mxu0
    %v1428 = vadd.f32 %v570, %v1427
    %v1429 = vpop.f32.mrf.mxu0
    %v1430 = vadd.f32 %v570, %v1429
    %1431 = vmatmul.bf16.gmra.mxu0 %v646
    %v1432 = vpop.f32.mrf.mxu0
    %v1433 = vadd.f32 %v570, %v1432
    %v1434 = vpop.f32.mrf.mxu0
    %v1435 = vadd.f32 %v570, %v1434
    %1436 = vmatmul.bf16.gmra.mxu0 %v647
    %v1437 = vpop.f32.mrf.mxu0
    %v1438 = vadd.f32 %v570, %v1437
    %v1439 = vpop.f32.mrf.mxu0
    %v1440 = vadd.f32 %v570, %v1439
    %1441 = vmatmul.bf16.gmra.mxu0 %v648
    %v1442 = vpop.f32.mrf.mxu0
    %v1443 = vadd.f32 %v570, %v1442
    %v1444 = vpop.f32.mrf.mxu0
    %v1445 = vadd.f32 %v570, %v1444
    %1446 = vmatmul.bf16.gmra.mxu0 %v649
    %v1447 = vpop.f32.mrf.mxu0
    %v1448 = vadd.f32 %v570, %v1447
    %v1449 = vpop.f32.mrf.mxu0
    %v1450 = vadd.f32 %v570, %v1449
    %1451 = vmatmul.bf16.gmra.mxu0 %v650
    %v1452 = vpop.f32.mrf.mxu0
    %v1453 = vadd.f32 %v570, %v1452
    %v1454 = vpop.f32.mrf.mxu0
    %v1455 = vadd.f32 %v570, %v1454
    %1456 = vmatmul.bf16.gmra.mxu0 %v651
    %v1457 = vpop.f32.mrf.mxu0
    %v1458 = vadd.f32 %v570, %v1457
    %v1459 = vpop.f32.mrf.mxu0
    %v1460 = vadd.f32 %v570, %v1459
    %1461 = vmatmul.bf16.gmra.mxu0 %v652
    %v1462 = vpop.f32.mrf.mxu0
    %v1463 = vadd.f32 %v570, %v1462
    %v1464 = vpop.f32.mrf.mxu0
    %v1465 = vadd.f32 %v570, %v1464
    %1466 = vmatmul.bf16.gmra.mxu0 %v653
    %v1467 = vpop.f32.mrf.mxu0
    %v1468 = vadd.f32 %v570, %v1467
    %v1469 = vpop.f32.mrf.mxu0
    %v1470 = vadd.f32 %v570, %v1469
    %1471 = vmatmul.bf16.gmra.mxu0 %v654
    %v1472 = vpop.f32.mrf.mxu0
    %v1473 = vadd.f32 %v570, %v1472
    %v1474 = vpop.f32.mrf.mxu0
    %v1475 = vadd.f32 %v570, %v1474
    %1476 = vmatmul.bf16.gmra.mxu0 %v655
    %v1477 = vpop.f32.mrf.mxu0
    %v1478 = vadd.f32 %v570, %v1477
    %v1479 = vpop.f32.mrf.mxu0
    %v1480 = vadd.f32 %v570, %v1479
    %1481 = vmatmul.bf16.gmra.mxu0 %v656
    %v1482 = vpop.f32.mrf.mxu0
    %v1483 = vadd.f32 %v570, %v1482
    %v1484 = vpop.f32.mrf.mxu0
    %v1485 = vadd.f32 %v570, %v1484
    %1486 = vmatmul.bf16.gmra.mxu0 %v657
    %v1487 = vpop.f32.mrf.mxu0
    %v1488 = vadd.f32 %v570, %v1487
    %v1489 = vpop.f32.mrf.mxu0
    %v1490 = vadd.f32 %v570, %v1489
    %1491 = vmatmul.bf16.gmra.mxu0 %v658
    %v1492 = vpop.f32.mrf.mxu0
    %v1493 = vadd.f32 %v570, %v1492
    %v1494 = vpop.f32.mrf.mxu0
    %v1495 = vadd.f32 %v570, %v1494
    %1496 = vdwg.mxu0
    %1497 = vmatpush.bf16.msra.mxu0 %v906
    %1498 = vmatpush.bf16.msra.mxu0 %v899
    %1499 = vmatpush.bf16.msra.mxu0 %v892
    %1500 = vmatpush.bf16.msra.mxu0 %v885
    %1501 = vmatpush.bf16.msra.mxu0 %v878
    %1502 = vmatpush.bf16.msra.mxu0 %v871
    %1503 = vmatpush.bf16.msra.mxu0 %v864
    %1504 = vmatpush.bf16.msra.mxu0 %v857
    %1505 = vmatmul.bf16.gmra.mxu0 %v643
    %v1506 = vpop.f32.mrf.mxu0
    %v1507 = vadd.f32 %v571, %v1506
    %v1508 = vpop.f32.mrf.mxu0
    %v1509 = vadd.f32 %v571, %v1508
    %1510 = vmatmul.bf16.gmra.mxu0 %v644
    %v1511 = vpop.f32.mrf.mxu0
    %v1512 = vadd.f32 %v571, %v1511
    %v1513 = vpop.f32.mrf.mxu0
    %v1514 = vadd.f32 %v571, %v1513
    %1515 = vmatmul.bf16.gmra.mxu0 %v645
    %v1516 = vpop.f32.mrf.mxu0
    %v1517 = vadd.f32 %v571, %v1516
    %v1518 = vpop.f32.mrf.mxu0
    %v1519 = vadd.f32 %v571, %v1518
    %1520 = vmatmul.bf16.gmra.mxu0 %v646
    %v1521 = vpop.f32.mrf.mxu0
    %v1522 = vadd.f32 %v571, %v1521
    %v1523 = vpop.f32.mrf.mxu0
    %v1524 = vadd.f32 %v571, %v1523
    %1525 = vmatmul.bf16.gmra.mxu0 %v647
    %v1526 = vpop.f32.mrf.mxu0
    %v1527 = vadd.f32 %v571, %v1526
    %v1528 = vpop.f32.mrf.mxu0
    %v1529 = vadd.f32 %v571, %v1528
    %1530 = vmatmul.bf16.gmra.mxu0 %v648
    %v1531 = vpop.f32.mrf.mxu0
    %v1532 = vadd.f32 %v571, %v1531
    %v1533 = vpop.f32.mrf.mxu0
    %v1534 = vadd.f32 %v571, %v1533
    %1535 = vmatmul.bf16.gmra.mxu0 %v649
    %v1536 = vpop.f32.mrf.mxu0
    %v1537 = vadd.f32 %v571, %v1536
    %v1538 = vpop.f32.mrf.mxu0
    %v1539 = vadd.f32 %v571, %v1538
    %1540 = vmatmul.bf16.gmra.mxu0 %v650
    %v1541 = vpop.f32.mrf.mxu0
    %v1542 = vadd.f32 %v571, %v1541
    %v1543 = vpop.f32.mrf.mxu0
    %v1544 = vadd.f32 %v571, %v1543
    %1545 = vmatmul.bf16.gmra.mxu0 %v651
    %v1546 = vpop.f32.mrf.mxu0
    %v1547 = vadd.f32 %v571, %v1546
    %v1548 = vpop.f32.mrf.mxu0
    %v1549 = vadd.f32 %v571, %v1548
    %1550 = vmatmul.bf16.gmra.mxu0 %v652
    %v1551 = vpop.f32.mrf.mxu0
    %v1552 = vadd.f32 %v571, %v1551
    %v1553 = vpop.f32.mrf.mxu0
    %v1554 = vadd.f32 %v571, %v1553
    %1555 = vmatmul.bf16.gmra.mxu0 %v653
    %v1556 = vpop.f32.mrf.mxu0
    %v1557 = vadd.f32 %v571, %v1556
    %v1558 = vpop.f32.mrf.mxu0
    %v1559 = vadd.f32 %v571, %v1558
    %1560 = vmatmul.bf16.gmra.mxu0 %v654
    %v1561 = vpop.f32.mrf.mxu0
    %v1562 = vadd.f32 %v571, %v1561
    %v1563 = vpop.f32.mrf.mxu0
    %v1564 = vadd.f32 %v571, %v1563
    %1565 = vmatmul.bf16.gmra.mxu0 %v655
    %v1566 = vpop.f32.mrf.mxu0
    %v1567 = vadd.f32 %v571, %v1566
    %v1568 = vpop.f32.mrf.mxu0
    %v1569 = vadd.f32 %v571, %v1568
    %1570 = vmatmul.bf16.gmra.mxu0 %v656
    %v1571 = vpop.f32.mrf.mxu0
    %v1572 = vadd.f32 %v571, %v1571
    %v1573 = vpop.f32.mrf.mxu0
    %v1574 = vadd.f32 %v571, %v1573
    %1575 = vmatmul.bf16.gmra.mxu0 %v657
    %v1576 = vpop.f32.mrf.mxu0
    %v1577 = vadd.f32 %v571, %v1576
    %v1578 = vpop.f32.mrf.mxu0
    %v1579 = vadd.f32 %v571, %v1578
    %1580 = vmatmul.bf16.gmra.mxu0 %v658
    %v1581 = vpop.f32.mrf.mxu0
    %v1582 = vadd.f32 %v571, %v1581
    %v1583 = vpop.f32.mrf.mxu0
    %v1584 = vadd.f32 %v571, %v1583
    %1585 = vdwg.mxu0
    %v1586 = vmul.f32 %v973, 0.5
    %v1587 = vmul.f32 %v1062, 0.5
    %v1588 = vmul.f32 %v1151, 0.5
    %v1589 = vmul.f32 %v1240, 0.5
    %v1590 = vmul.f32 %v1329, 0.5
    %v1591 = vmul.f32 %v1418, 0.5
    %v1592 = vmul.f32 %v1507, 0.5
    %v1593 = vmul.f32 %v975, 0.5
    %v1594 = vmul.f32 %v1064, 0.5
    %v1595 = vmul.f32 %v1153, 0.5
    %v1596 = vmul.f32 %v1242, 0.5
    %v1597 = vmul.f32 %v1331, 0.5
    %v1598 = vmul.f32 %v1420, 0.5
    %v1599 = vmul.f32 %v1509, 0.5
    %v1600 = vmul.f32 %v978, 0.5
    %v1601 = vmul.f32 %v1067, 0.5
    %v1602 = vmul.f32 %v1156, 0.5
    %v1603 = vmul.f32 %v1245, 0.5
    %v1604 = vmul.f32 %v1334, 0.5
    %v1605 = vmul.f32 %v1423, 0.5
    %v1606 = vmul.f32 %v1512, 0.5
    %v1607 = vmul.f32 %v980, 0.5
    %v1608 = vmul.f32 %v1069, 0.5
    %v1609 = vmul.f32 %v1158, 0.5
    %v1610 = vmul.f32 %v1247, 0.5
    %v1611 = vmul.f32 %v1336, 0.5
    %v1612 = vmul.f32 %v1425, 0.5
    %v1613 = vmul.f32 %v1514, 0.5
    %v1614 = vmul.f32 %v983, 0.5
    %v1615 = vmul.f32 %v1072, 0.5
    %v1616 = vmul.f32 %v1161, 0.5
    %v1617 = vmul.f32 %v1250, 0.5
    %v1618 = vmul.f32 %v1339, 0.5
    %v1619 = vmul.f32 %v1428, 0.5
    %v1620 = vmul.f32 %v1517, 0.5
    %v1621 = vmul.f32 %v985, 0.5
    %v1622 = vmul.f32 %v1074, 0.5
    %v1623 = vmul.f32 %v1163, 0.5
    %v1624 = vmul.f32 %v1252, 0.5
    %v1625 = vmul.f32 %v1341, 0.5
    %v1626 = vmul.f32 %v1430, 0.5
    %v1627 = vmul.f32 %v1519, 0.5
    %v1628 = vmul.f32 %v988, 0.5
    %v1629 = vmul.f32 %v1077, 0.5
    %v1630 = vmul.f32 %v1166, 0.5
    %v1631 = vmul.f32 %v1255, 0.5
    %v1632 = vmul.f32 %v1344, 0.5
    %v1633 = vmul.f32 %v1433, 0.5
    %v1634 = vmul.f32 %v1522, 0.5
    %v1635 = vmul.f32 %v990, 0.5
    %v1636 = vmul.f32 %v1079, 0.5
    %v1637 = vmul.f32 %v1168, 0.5
    %v1638 = vmul.f32 %v1257, 0.5
    %v1639 = vmul.f32 %v1346, 0.5
    %v1640 = vmul.f32 %v1435, 0.5
    %v1641 = vmul.f32 %v1524, 0.5
    %v1642 = vmul.f32 %v993, 0.5
    %v1643 = vmul.f32 %v1082, 0.5
    %v1644 = vmul.f32 %v1171, 0.5
    %v1645 = vmul.f32 %v1260, 0.5
    %v1646 = vmul.f32 %v1349, 0.5
    %v1647 = vmul.f32 %v1438, 0.5
    %v1648 = vmul.f32 %v1527, 0.5
    %v1649 = vmul.f32 %v995, 0.5
    %v1650 = vmul.f32 %v1084, 0.5
    %v1651 = vmul.f32 %v1173, 0.5
    %v1652 = vmul.f32 %v1262, 0.5
    %v1653 = vmul.f32 %v1351, 0.5
    %v1654 = vmul.f32 %v1440, 0.5
    %v1655 = vmul.f32 %v1529, 0.5
    %v1656 = vmul.f32 %v998, 0.5
    %v1657 = vmul.f32 %v1087, 0.5
    %v1658 = vmul.f32 %v1176, 0.5
    %v1659 = vmul.f32 %v1265, 0.5
    %v1660 = vmul.f32 %v1354, 0.5
    %v1661 = vmul.f32 %v1443, 0.5
    %v1662 = vmul.f32 %v1532, 0.5
    %v1663 = vmul.f32 %v1000, 0.5
    %v1664 = vmul.f32 %v1089, 0.5
    %v1665 = vmul.f32 %v1178, 0.5
    %v1666 = vmul.f32 %v1267, 0.5
    %v1667 = vmul.f32 %v1356, 0.5
    %v1668 = vmul.f32 %v1445, 0.5
    %v1669 = vmul.f32 %v1534, 0.5
    %v1670 = vmul.f32 %v1003, 0.5
    %v1671 = vmul.f32 %v1092, 0.5
    %v1672 = vmul.f32 %v1181, 0.5
    %v1673 = vmul.f32 %v1270, 0.5
    %v1674 = vmul.f32 %v1359, 0.5
    %v1675 = vmul.f32 %v1448, 0.5
    %v1676 = vmul.f32 %v1537, 0.5
    %v1677 = vmul.f32 %v1005, 0.5
    %v1678 = vmul.f32 %v1094, 0.5
    %v1679 = vmul.f32 %v1183, 0.5
    %v1680 = vmul.f32 %v1272, 0.5
    %v1681 = vmul.f32 %v1361, 0.5
    %v1682 = vmul.f32 %v1450, 0.5
    %v1683 = vmul.f32 %v1539, 0.5
    %v1684 = vmul.f32 %v1008, 0.5
    %v1685 = vmul.f32 %v1097, 0.5
    %v1686 = vmul.f32 %v1186, 0.5
    %v1687 = vmul.f32 %v1275, 0.5
    %v1688 = vmul.f32 %v1364, 0.5
    %v1689 = vmul.f32 %v1453, 0.5
    %v1690 = vmul.f32 %v1542, 0.5
    %v1691 = vmul.f32 %v1010, 0.5
    %v1692 = vmul.f32 %v1099, 0.5
    %v1693 = vmul.f32 %v1188, 0.5
    %v1694 = vmul.f32 %v1277, 0.5
    %v1695 = vmul.f32 %v1366, 0.5
    %v1696 = vmul.f32 %v1455, 0.5
    %v1697 = vmul.f32 %v1544, 0.5
    %v1698 = vmul.f32 %v1013, 0.5
    %v1699 = vmul.f32 %v1102, 0.5
    %v1700 = vmul.f32 %v1191, 0.5
    %v1701 = vmul.f32 %v1280, 0.5
    %v1702 = vmul.f32 %v1369, 0.5
    %v1703 = vmul.f32 %v1458, 0.5
    %v1704 = vmul.f32 %v1547, 0.5
    %v1705 = vmul.f32 %v1015, 0.5
    %v1706 = vmul.f32 %v1104, 0.5
    %v1707 = vmul.f32 %v1193, 0.5
    %v1708 = vmul.f32 %v1282, 0.5
    %v1709 = vmul.f32 %v1371, 0.5
    %v1710 = vmul.f32 %v1460, 0.5
    %v1711 = vmul.f32 %v1549, 0.5
    %v1712 = vmul.f32 %v1018, 0.5
    %v1713 = vmul.f32 %v1107, 0.5
    %v1714 = vmul.f32 %v1196, 0.5
    %v1715 = vmul.f32 %v1285, 0.5
    %v1716 = vmul.f32 %v1374, 0.5
    %v1717 = vmul.f32 %v1463, 0.5
    %v1718 = vmul.f32 %v1552, 0.5
    %v1719 = vmul.f32 %v1020, 0.5
    %v1720 = vmul.f32 %v1109, 0.5
    %v1721 = vmul.f32 %v1198, 0.5
    %v1722 = vmul.f32 %v1287, 0.5
    %v1723 = vmul.f32 %v1376, 0.5
    %v1724 = vmul.f32 %v1465, 0.5
    %v1725 = vmul.f32 %v1554, 0.5
    %v1726 = vmul.f32 %v1023, 0.5
    %v1727 = vmul.f32 %v1112, 0.5
    %v1728 = vmul.f32 %v1201, 0.5
    %v1729 = vmul.f32 %v1290, 0.5
    %v1730 = vmul.f32 %v1379, 0.5
    %v1731 = vmul.f32 %v1468, 0.5
    %v1732 = vmul.f32 %v1557, 0.5
    %v1733 = vmul.f32 %v1025, 0.5
    %v1734 = vmul.f32 %v1114, 0.5
    %v1735 = vmul.f32 %v1203, 0.5
    %v1736 = vmul.f32 %v1292, 0.5
    %v1737 = vmul.f32 %v1381, 0.5
    %v1738 = vmul.f32 %v1470, 0.5
    %v1739 = vmul.f32 %v1559, 0.5
    %v1740 = vmul.f32 %v1028, 0.5
    %v1741 = vmul.f32 %v1117, 0.5
    %v1742 = vmul.f32 %v1206, 0.5
    %v1743 = vmul.f32 %v1295, 0.5
    %v1744 = vmul.f32 %v1384, 0.5
    %v1745 = vmul.f32 %v1473, 0.5
    %v1746 = vmul.f32 %v1562, 0.5
    %v1747 = vmul.f32 %v1030, 0.5
    %v1748 = vmul.f32 %v1119, 0.5
    %v1749 = vmul.f32 %v1208, 0.5
    %v1750 = vmul.f32 %v1297, 0.5
    %v1751 = vmul.f32 %v1386, 0.5
    %v1752 = vmul.f32 %v1475, 0.5
    %v1753 = vmul.f32 %v1564, 0.5
    %v1754 = vmul.f32 %v1033, 0.5
    %v1755 = vmul.f32 %v1122, 0.5
    %v1756 = vmul.f32 %v1211, 0.5
    %v1757 = vmul.f32 %v1300, 0.5
    %v1758 = vmul.f32 %v1389, 0.5
    %v1759 = vmul.f32 %v1478, 0.5
    %v1760 = vmul.f32 %v1567, 0.5
    %v1761 = vmul.f32 %v1035, 0.5
    %v1762 = vmul.f32 %v1124, 0.5
    %v1763 = vmul.f32 %v1213, 0.5
    %v1764 = vmul.f32 %v1302, 0.5
    %v1765 = vmul.f32 %v1391, 0.5
    %v1766 = vmul.f32 %v1480, 0.5
    %v1767 = vmul.f32 %v1569, 0.5
    %v1768 = vmul.f32 %v1038, 0.5
    %v1769 = vmul.f32 %v1127, 0.5
    %v1770 = vmul.f32 %v1216, 0.5
    %v1771 = vmul.f32 %v1305, 0.5
    %v1772 = vmul.f32 %v1394, 0.5
    %v1773 = vmul.f32 %v1483, 0.5
    %v1774 = vmul.f32 %v1572, 0.5
    %v1775 = vmul.f32 %v1040, 0.5
    %v1776 = vmul.f32 %v1129, 0.5
    %v1777 = vmul.f32 %v1218, 0.5
    %v1778 = vmul.f32 %v1307, 0.5
    %v1779 = vmul.f32 %v1396, 0.5
    %v1780 = vmul.f32 %v1485, 0.5
    %v1781 = vmul.f32 %v1574, 0.5
    %v1782 = vmul.f32 %v1043, 0.5
    %v1783 = vmul.f32 %v1132, 0.5
    %v1784 = vmul.f32 %v1221, 0.5
    %v1785 = vmul.f32 %v1310, 0.5
    %v1786 = vmul.f32 %v1399, 0.5
    %v1787 = vmul.f32 %v1488, 0.5
    %v1788 = vmul.f32 %v1577, 0.5
    %v1789 = vmul.f32 %v1045, 0.5
    %v1790 = vmul.f32 %v1134, 0.5
    %v1791 = vmul.f32 %v1223, 0.5
    %v1792 = vmul.f32 %v1312, 0.5
    %v1793 = vmul.f32 %v1401, 0.5
    %v1794 = vmul.f32 %v1490, 0.5
    %v1795 = vmul.f32 %v1579, 0.5
    %v1796 = vmul.f32 %v1048, 0.5
    %v1797 = vmul.f32 %v1137, 0.5
    %v1798 = vmul.f32 %v1226, 0.5
    %v1799 = vmul.f32 %v1315, 0.5
    %v1800 = vmul.f32 %v1404, 0.5
    %v1801 = vmul.f32 %v1493, 0.5
    %v1802 = vmul.f32 %v1582, 0.5
    %v1803 = vmul.f32 %v1050, 0.5
    %v1804 = vmul.f32 %v1139, 0.5
    %v1805 = vmul.f32 %v1228, 0.5
    %v1806 = vmul.f32 %v1317, 0.5
    %v1807 = vmul.f32 %v1406, 0.5
    %v1808 = vmul.f32 %v1495, 0.5
    %v1809 = vmul.f32 %v1584, 0.5
    %v1810 = vtanh.pop %v1586
    %v1811 = vtanh.pop %v1587
    %v1812 = vtanh.pop %v1588
    %v1813 = vtanh.pop %v1589
    %v1814 = vtanh.pop %v1590
    %v1815 = vtanh.pop %v1591
    %v1816 = vtanh.pop %v1592
    %v1817 = vtanh.pop %v1593
    %v1818 = vtanh.pop %v1594
    %v1819 = vtanh.pop %v1595
    %v1820 = vtanh.pop %v1596
    %v1821 = vtanh.pop %v1597
    %v1822 = vtanh.pop %v1598
    %v1823 = vtanh.pop %v1599
    %v1824 = vtanh.pop %v1600
    %v1825 = vtanh.pop %v1601
    %v1826 = vtanh.pop %v1602
    %v1827 = vtanh.pop %v1603
    %v1828 = vtanh.pop %v1604
    %v1829 = vtanh.pop %v1605
    %v1830 = vtanh.pop %v1606
    %v1831 = vtanh.pop %v1607
    %v1832 = vtanh.pop %v1608
    %v1833 = vtanh.pop %v1609
    %v1834 = vtanh.pop %v1610
    %v1835 = vtanh.pop %v1611
    %v1836 = vtanh.pop %v1612
    %v1837 = vtanh.pop %v1613
    %v1838 = vtanh.pop %v1614
    %v1839 = vtanh.pop %v1615
    %v1840 = vtanh.pop %v1616
    %v1841 = vtanh.pop %v1617
    %v1842 = vtanh.pop %v1618
    %v1843 = vtanh.pop %v1619
    %v1844 = vtanh.pop %v1620
    %v1845 = vtanh.pop %v1621
    %v1846 = vtanh.pop %v1622
    %v1847 = vtanh.pop %v1623
    %v1848 = vtanh.pop %v1624
    %v1849 = vtanh.pop %v1625
    %v1850 = vtanh.pop %v1626
    %v1851 = vtanh.pop %v1627
    %v1852 = vtanh.pop %v1628
    %v1853 = vtanh.pop %v1629
    %v1854 = vtanh.pop %v1630
    %v1855 = vtanh.pop %v1631
    %v1856 = vtanh.pop %v1632
    %v1857 = vtanh.pop %v1633
    %v1858 = vtanh.pop %v1634
    %v1859 = vtanh.pop %v1635
    %v1860 = vtanh.pop %v1636
    %v1861 = vtanh.pop %v1637
    %v1862 = vtanh.pop %v1638
    %v1863 = vtanh.pop %v1639
    %v1864 = vtanh.pop %v1640
    %v1865 = vtanh.pop %v1641
    %v1866 = vtanh.pop %v1642
    %v1867 = vtanh.pop %v1643
    %v1868 = vtanh.pop %v1644
    %v1869 = vtanh.pop %v1645
    %v1870 = vtanh.pop %v1646
    %v1871 = vtanh.pop %v1647
    %v1872 = vtanh.pop %v1648
    %v1873 = vtanh.pop %v1649
    %v1874 = vtanh.pop %v1650
    %v1875 = vtanh.pop %v1651
    %v1876 = vtanh.pop %v1652
    %v1877 = vtanh.pop %v1653
    %v1878 = vtanh.pop %v1654
    %v1879 = vtanh.pop %v1655
    %v1880 = vtanh.pop %v1656
    %v1881 = vtanh.pop %v1657
    %v1882 = vtanh.pop %v1658
    %v1883 = vtanh.pop %v1659
    %v1884 = vtanh.pop %v1660
    %v1885 = vtanh.pop %v1661
    %v1886 = vtanh.pop %v1662
    %v1887 = vtanh.pop %v1663
    %v1888 = vtanh.pop %v1664
    %v1889 = vtanh.pop %v1665
    %v1890 = vtanh.pop %v1666
    %v1891 = vtanh.pop %v1667
    %v1892 = vtanh.pop %v1668
    %v1893 = vtanh.pop %v1669
    %v1894 = vtanh.pop %v1670
    %v1895 = vtanh.pop %v1671
    %v1896 = vtanh.pop %v1672
    %v1897 = vtanh.pop %v1673
    %v1898 = vtanh.pop %v1674
    %v1899 = vtanh.pop %v1675
    %v1900 = vtanh.pop %v1676
    %v1901 = vtanh.pop %v1677
    %v1902 = vtanh.pop %v1678
    %v1903 = vtanh.pop %v1679
    %v1904 = vtanh.pop %v1680
    %v1905 = vtanh.pop %v1681
    %v1906 = vtanh.pop %v1682
    %v1907 = vtanh.pop %v1683
    %v1908 = vtanh.pop %v1684
    %v1909 = vtanh.pop %v1685
    %v1910 = vtanh.pop %v1686
    %v1911 = vtanh.pop %v1687
    %v1912 = vtanh.pop %v1688
    %v1913 = vtanh.pop %v1689
    %v1914 = vtanh.pop %v1690
    %v1915 = vtanh.pop %v1691
    %v1916 = vtanh.pop %v1692
    %v1917 = vtanh.pop %v1693
    %v1918 = vtanh.pop %v1694
    %v1919 = vtanh.pop %v1695
    %v1920 = vtanh.pop %v1696
    %v1921 = vtanh.pop %v1697
    %v1922 = vtanh.pop %v1698
    %v1923 = vtanh.pop %v1699
    %v1924 = vtanh.pop %v1700
    %v1925 = vtanh.pop %v1701
    %v1926 = vtanh.pop %v1702
    %v1927 = vtanh.pop %v1703
    %v1928 = vtanh.pop %v1704
    %v1929 = vtanh.pop %v1705
    %v1930 = vtanh.pop %v1706
    %v1931 = vtanh.pop %v1707
    %v1932 = vtanh.pop %v1708
    %v1933 = vtanh.pop %v1709
    %v1934 = vtanh.pop %v1710
    %v1935 = vtanh.pop %v1711
    %v1936 = vtanh.pop %v1712
    %v1937 = vtanh.pop %v1713
    %v1938 = vtanh.pop %v1714
    %v1939 = vtanh.pop %v1715
    %v1940 = vtanh.pop %v1716
    %v1941 = vtanh.pop %v1717
    %v1942 = vtanh.pop %v1718
    %v1943 = vtanh.pop %v1719
    %v1944 = vtanh.pop %v1720
    %v1945 = vtanh.pop %v1721
    %v1946 = vtanh.pop %v1722
    %v1947 = vtanh.pop %v1723
    %v1948 = vtanh.pop %v1724
    %v1949 = vtanh.pop %v1725
    %v1950 = vtanh.pop %v1726
    %v1951 = vtanh.pop %v1727
    %v1952 = vtanh.pop %v1728
    %v1953 = vtanh.pop %v1729
    %v1954 = vtanh.pop %v1730
    %v1955 = vtanh.pop %v1731
    %v1956 = vtanh.pop %v1732
    %v1957 = vtanh.pop %v1733
    %v1958 = vtanh.pop %v1734
    %v1959 = vtanh.pop %v1735
    %v1960 = vtanh.pop %v1736
    %v1961 = vtanh.pop %v1737
    %v1962 = vtanh.pop %v1738
    %v1963 = vtanh.pop %v1739
    %v1964 = vtanh.pop %v1740
    %v1965 = vtanh.pop %v1741
    %v1966 = vtanh.pop %v1742
    %v1967 = vtanh.pop %v1743
    %v1968 = vtanh.pop %v1744
    %v1969 = vtanh.pop %v1745
    %v1970 = vtanh.pop %v1746
    %v1971 = vtanh.pop %v1747
    %v1972 = vtanh.pop %v1748
    %v1973 = vtanh.pop %v1749
    %v1974 = vtanh.pop %v1750
    %v1975 = vtanh.pop %v1751
    %v1976 = vtanh.pop %v1752
    %v1977 = vtanh.pop %v1753
    %v1978 = vtanh.pop %v1754
    %v1979 = vtanh.pop %v1755
    %v1980 = vtanh.pop %v1756
    %v1981 = vtanh.pop %v1757
    %v1982 = vtanh.pop %v1758
    %v1983 = vtanh.pop %v1759
    %v1984 = vtanh.pop %v1760
    %v1985 = vtanh.pop %v1761
    %v1986 = vtanh.pop %v1762
    %v1987 = vtanh.pop %v1763
    %v1988 = vtanh.pop %v1764
    %v1989 = vtanh.pop %v1765
    %v1990 = vtanh.pop %v1766
    %v1991 = vtanh.pop %v1767
    %v1992 = vtanh.pop %v1768
    %v1993 = vtanh.pop %v1769
    %v1994 = vtanh.pop %v1770
    %v1995 = vtanh.pop %v1771
    %v1996 = vtanh.pop %v1772
    %v1997 = vtanh.pop %v1773
    %v1998 = vtanh.pop %v1774
    %v1999 = vtanh.pop %v1775
    %v2000 = vtanh.pop %v1776
    %v2001 = vtanh.pop %v1777
    %v2002 = vtanh.pop %v1778
    %v2003 = vtanh.pop %v1779
    %v2004 = vtanh.pop %v1780
    %v2005 = vtanh.pop %v1781
    %v2006 = vtanh.pop %v1782
    %v2007 = vtanh.pop %v1783
    %v2008 = vtanh.pop %v1784
    %v2009 = vtanh.pop %v1785
    %v2010 = vtanh.pop %v1786
    %v2011 = vtanh.pop %v1787
    %v2012 = vtanh.pop %v1788
    %v2013 = vtanh.pop %v1789
    %v2014 = vtanh.pop %v1790
    %v2015 = vtanh.pop %v1791
    %v2016 = vtanh.pop %v1792
    %v2017 = vtanh.pop %v1793
    %v2018 = vtanh.pop %v1794
    %v2019 = vtanh.pop %v1795
    %v2020 = vtanh.pop %v1796
    %v2021 = vtanh.pop %v1797
    %v2022 = vtanh.pop %v1798
    %v2023 = vtanh.pop %v1799
    %v2024 = vtanh.pop %v1800
    %v2025 = vtanh.pop %v1801
    %v2026 = vtanh.pop %v1802
    %v2027 = vtanh.pop %v1803
    %v2028 = vtanh.pop %v1804
    %v2029 = vtanh.pop %v1805
    %v2030 = vtanh.pop %v1806
    %v2031 = vtanh.pop %v1807
    %v2032 = vtanh.pop %v1808
    %v2033 = vtanh.pop %v1809
    %v2034 = vmul.f32 %v1810, 0.5
    %v2035 = vmul.f32 %v1811, 0.5
    %v2036 = vmul.f32 %v1812, 0.5
    %v2037 = vmul.f32 %v1813, 0.5
    %v2038 = vmul.f32 %v1814, 0.5
    %v2039 = vmul.f32 %v1815, 0.5
    %v2040 = vmul.f32 %v1816, 0.5
    %v2041 = vmul.f32 %v1817, 0.5
    %v2042 = vmul.f32 %v1818, 0.5
    %v2043 = vmul.f32 %v1819, 0.5
    %v2044 = vmul.f32 %v1820, 0.5
    %v2045 = vmul.f32 %v1821, 0.5
    %v2046 = vmul.f32 %v1822, 0.5
    %v2047 = vmul.f32 %v1823, 0.5
    %v2048 = vmul.f32 %v1824, 0.5
    %v2049 = vmul.f32 %v1825, 0.5
    %v2050 = vmul.f32 %v1826, 0.5
    %v2051 = vmul.f32 %v1827, 0.5
    %v2052 = vmul.f32 %v1828, 0.5
    %v2053 = vmul.f32 %v1829, 0.5
    %v2054 = vmul.f32 %v1830, 0.5
    %v2055 = vmul.f32 %v1831, 0.5
    %v2056 = vmul.f32 %v1832, 0.5
    %v2057 = vmul.f32 %v1833, 0.5
    %v2058 = vmul.f32 %v1834, 0.5
    %v2059 = vmul.f32 %v1835, 0.5
    %v2060 = vmul.f32 %v1836, 0.5
    %v2061 = vmul.f32 %v1837, 0.5
    %v2062 = vmul.f32 %v1838, 0.5
    %v2063 = vmul.f32 %v1839, 0.5
    %v2064 = vmul.f32 %v1840, 0.5
    %v2065 = vmul.f32 %v1841, 0.5
    %v2066 = vmul.f32 %v1842, 0.5
    %v2067 = vmul.f32 %v1843, 0.5
    %v2068 = vmul.f32 %v1844, 0.5
    %v2069 = vmul.f32 %v1845, 0.5
    %v2070 = vmul.f32 %v1846, 0.5
    %v2071 = vmul.f32 %v1847, 0.5
    %v2072 = vmul.f32 %v1848, 0.5
    %v2073 = vmul.f32 %v1849, 0.5
    %v2074 = vmul.f32 %v1850, 0.5
    %v2075 = vmul.f32 %v1851, 0.5
    %v2076 = vmul.f32 %v1852, 0.5
    %v2077 = vmul.f32 %v1853, 0.5
    %v2078 = vmul.f32 %v1854, 0.5
    %v2079 = vmul.f32 %v1855, 0.5
    %v2080 = vmul.f32 %v1856, 0.5
    %v2081 = vmul.f32 %v1857, 0.5
    %v2082 = vmul.f32 %v1858, 0.5
    %v2083 = vmul.f32 %v1859, 0.5
    %v2084 = vmul.f32 %v1860, 0.5
    %v2085 = vmul.f32 %v1861, 0.5
    %v2086 = vmul.f32 %v1862, 0.5
    %v2087 = vmul.f32 %v1863, 0.5
    %v2088 = vmul.f32 %v1864, 0.5
    %v2089 = vmul.f32 %v1865, 0.5
    %v2090 = vmul.f32 %v1866, 0.5
    %v2091 = vmul.f32 %v1867, 0.5
    %v2092 = vmul.f32 %v1868, 0.5
    %v2093 = vmul.f32 %v1869, 0.5
    %v2094 = vmul.f32 %v1870, 0.5
    %v2095 = vmul.f32 %v1871, 0.5
    %v2096 = vmul.f32 %v1872, 0.5
    %v2097 = vmul.f32 %v1873, 0.5
    %v2098 = vmul.f32 %v1874, 0.5
    %v2099 = vmul.f32 %v1875, 0.5
    %v2100 = vmul.f32 %v1876, 0.5
    %v2101 = vmul.f32 %v1877, 0.5
    %v2102 = vmul.f32 %v1878, 0.5
    %v2103 = vmul.f32 %v1879, 0.5
    %v2104 = vmul.f32 %v1880, 0.5
    %v2105 = vmul.f32 %v1881, 0.5
    %v2106 = vmul.f32 %v1882, 0.5
    %v2107 = vmul.f32 %v1883, 0.5
    %v2108 = vmul.f32 %v1884, 0.5
    %v2109 = vmul.f32 %v1885, 0.5
    %v2110 = vmul.f32 %v1886, 0.5
    %v2111 = vmul.f32 %v1887, 0.5
    %v2112 = vmul.f32 %v1888, 0.5
    %v2113 = vmul.f32 %v1889, 0.5
    %v2114 = vmul.f32 %v1890, 0.5
    %v2115 = vmul.f32 %v1891, 0.5
    %v2116 = vmul.f32 %v1892, 0.5
    %v2117 = vmul.f32 %v1893, 0.5
    %v2118 = vmul.f32 %v1894, 0.5
    %v2119 = vmul.f32 %v1895, 0.5
    %v2120 = vmul.f32 %v1896, 0.5
    %v2121 = vmul.f32 %v1897, 0.5
    %v2122 = vmul.f32 %v1898, 0.5
    %v2123 = vmul.f32 %v1899, 0.5
    %v2124 = vmul.f32 %v1900, 0.5
    %v2125 = vmul.f32 %v1901, 0.5
    %v2126 = vmul.f32 %v1902, 0.5
    %v2127 = vmul.f32 %v1903, 0.5
    %v2128 = vmul.f32 %v1904, 0.5
    %v2129 = vmul.f32 %v1905, 0.5
    %v2130 = vmul.f32 %v1906, 0.5
    %v2131 = vmul.f32 %v1907, 0.5
    %v2132 = vmul.f32 %v1908, 0.5
    %v2133 = vmul.f32 %v1909, 0.5
    %v2134 = vmul.f32 %v1910, 0.5
    %v2135 = vmul.f32 %v1911, 0.5
    %v2136 = vmul.f32 %v1912, 0.5
    %v2137 = vmul.f32 %v1913, 0.5
    %v2138 = vmul.f32 %v1914, 0.5
    %v2139 = vmul.f32 %v1915, 0.5
    %v2140 = vmul.f32 %v1916, 0.5
    %v2141 = vmul.f32 %v1917, 0.5
    %v2142 = vmul.f32 %v1918, 0.5
    %v2143 = vmul.f32 %v1919, 0.5
    %v2144 = vmul.f32 %v1920, 0.5
    %v2145 = vmul.f32 %v1921, 0.5
    %v2146 = vmul.f32 %v1922, 0.5
    %v2147 = vmul.f32 %v1923, 0.5
    %v2148 = vmul.f32 %v1924, 0.5
    %v2149 = vmul.f32 %v1925, 0.5
    %v2150 = vmul.f32 %v1926, 0.5
    %v2151 = vmul.f32 %v1927, 0.5
    %v2152 = vmul.f32 %v1928, 0.5
    %v2153 = vmul.f32 %v1929, 0.5
    %v2154 = vmul.f32 %v1930, 0.5
    %v2155 = vmul.f32 %v1931, 0.5
    %v2156 = vmul.f32 %v1932, 0.5
    %v2157 = vmul.f32 %v1933, 0.5
    %v2158 = vmul.f32 %v1934, 0.5
    %v2159 = vmul.f32 %v1935, 0.5
    %v2160 = vmul.f32 %v1936, 0.5
    %v2161 = vmul.f32 %v1937, 0.5
    %v2162 = vmul.f32 %v1938, 0.5
    %v2163 = vmul.f32 %v1939, 0.5
    %v2164 = vmul.f32 %v1940, 0.5
    %v2165 = vmul.f32 %v1941, 0.5
    %v2166 = vmul.f32 %v1942, 0.5
    %v2167 = vmul.f32 %v1943, 0.5
    %v2168 = vmul.f32 %v1944, 0.5
    %v2169 = vmul.f32 %v1945, 0.5
    %v2170 = vmul.f32 %v1946, 0.5
    %v2171 = vmul.f32 %v1947, 0.5
    %v2172 = vmul.f32 %v1948, 0.5
    %v2173 = vmul.f32 %v1949, 0.5
    %v2174 = vmul.f32 %v1950, 0.5
    %v2175 = vmul.f32 %v1951, 0.5
    %v2176 = vmul.f32 %v1952, 0.5
    %v2177 = vmul.f32 %v1953, 0.5
    %v2178 = vmul.f32 %v1954, 0.5
    %v2179 = vmul.f32 %v1955, 0.5
    %v2180 = vmul.f32 %v1956, 0.5
    %v2181 = vmul.f32 %v1957, 0.5
    %v2182 = vmul.f32 %v1958, 0.5
    %v2183 = vmul.f32 %v1959, 0.5
    %v2184 = vmul.f32 %v1960, 0.5
    %v2185 = vmul.f32 %v1961, 0.5
    %v2186 = vmul.f32 %v1962, 0.5
    %v2187 = vmul.f32 %v1963, 0.5
    %v2188 = vmul.f32 %v1964, 0.5
    %v2189 = vmul.f32 %v1965, 0.5
    %v2190 = vmul.f32 %v1966, 0.5
    %v2191 = vmul.f32 %v1967, 0.5
    %v2192 = vmul.f32 %v1968, 0.5
    %v2193 = vmul.f32 %v1969, 0.5
    %v2194 = vmul.f32 %v1970, 0.5
    %v2195 = vmul.f32 %v1971, 0.5
    %v2196 = vmul.f32 %v1972, 0.5
    %v2197 = vmul.f32 %v1973, 0.5
    %v2198 = vmul.f32 %v1974, 0.5
    %v2199 = vmul.f32 %v1975, 0.5
    %v2200 = vmul.f32 %v1976, 0.5
    %v2201 = vmul.f32 %v1977, 0.5
    %v2202 = vmul.f32 %v1978, 0.5
    %v2203 = vmul.f32 %v1979, 0.5
    %v2204 = vmul.f32 %v1980, 0.5
    %v2205 = vmul.f32 %v1981, 0.5
    %v2206 = vmul.f32 %v1982, 0.5
    %v2207 = vmul.f32 %v1983, 0.5
    %v2208 = vmul.f32 %v1984, 0.5
    %v2209 = vmul.f32 %v1985, 0.5
    %v2210 = vmul.f32 %v1986, 0.5
    %v2211 = vmul.f32 %v1987, 0.5
    %v2212 = vmul.f32 %v1988, 0.5
    %v2213 = vmul.f32 %v1989, 0.5
    %v2214 = vmul.f32 %v1990, 0.5
    %v2215 = vmul.f32 %v1991, 0.5
    %v2216 = vmul.f32 %v1992, 0.5
    %v2217 = vmul.f32 %v1993, 0.5
    %v2218 = vmul.f32 %v1994, 0.5
    %v2219 = vmul.f32 %v1995, 0.5
    %v2220 = vmul.f32 %v1996, 0.5
    %v2221 = vmul.f32 %v1997, 0.5
    %v2222 = vmul.f32 %v1998, 0.5
    %v2223 = vmul.f32 %v1999, 0.5
    %v2224 = vmul.f32 %v2000, 0.5
    %v2225 = vmul.f32 %v2001, 0.5
    %v2226 = vmul.f32 %v2002, 0.5
    %v2227 = vmul.f32 %v2003, 0.5
    %v2228 = vmul.f32 %v2004, 0.5
    %v2229 = vmul.f32 %v2005, 0.5
    %v2230 = vmul.f32 %v2006, 0.5
    %v2231 = vmul.f32 %v2007, 0.5
    %v2232 = vmul.f32 %v2008, 0.5
    %v2233 = vmul.f32 %v2009, 0.5
    %v2234 = vmul.f32 %v2010, 0.5
    %v2235 = vmul.f32 %v2011, 0.5
    %v2236 = vmul.f32 %v2012, 0.5
    %v2237 = vmul.f32 %v2013, 0.5
    %v2238 = vmul.f32 %v2014, 0.5
    %v2239 = vmul.f32 %v2015, 0.5
    %v2240 = vmul.f32 %v2016, 0.5
    %v2241 = vmul.f32 %v2017, 0.5
    %v2242 = vmul.f32 %v2018, 0.5
    %v2243 = vmul.f32 %v2019, 0.5
    %v2244 = vmul.f32 %v2020, 0.5
    %v2245 = vmul.f32 %v2021, 0.5
    %v2246 = vmul.f32 %v2022, 0.5
    %v2247 = vmul.f32 %v2023, 0.5
    %v2248 = vmul.f32 %v2024, 0.5
    %v2249 = vmul.f32 %v2025, 0.5
    %v2250 = vmul.f32 %v2026, 0.5
    %v2251 = vmul.f32 %v2027, 0.5
    %v2252 = vmul.f32 %v2028, 0.5
    %v2253 = vmul.f32 %v2029, 0.5
    %v2254 = vmul.f32 %v2030, 0.5
    %v2255 = vmul.f32 %v2031, 0.5
    %v2256 = vmul.f32 %v2032, 0.5
    %v2257 = vmul.f32 %v2033, 0.5
    %v2258 = vadd.f32 %v2034, 0.5
    %v2259 = vadd.f32 %v2035, 0.5
    %v2260 = vadd.f32 %v2036, 0.5
    %v2261 = vadd.f32 %v2037, 0.5
    %v2262 = vadd.f32 %v2038, 0.5
    %v2263 = vadd.f32 %v2039, 0.5
    %v2264 = vadd.f32 %v2040, 0.5
    %v2265 = vadd.f32 %v2041, 0.5
    %v2266 = vadd.f32 %v2042, 0.5
    %v2267 = vadd.f32 %v2043, 0.5
    %v2268 = vadd.f32 %v2044, 0.5
    %v2269 = vadd.f32 %v2045, 0.5
    %v2270 = vadd.f32 %v2046, 0.5
    %v2271 = vadd.f32 %v2047, 0.5
    %v2272 = vadd.f32 %v2048, 0.5
    %v2273 = vadd.f32 %v2049, 0.5
    %v2274 = vadd.f32 %v2050, 0.5
    %v2275 = vadd.f32 %v2051, 0.5
    %v2276 = vadd.f32 %v2052, 0.5
    %v2277 = vadd.f32 %v2053, 0.5
    %v2278 = vadd.f32 %v2054, 0.5
    %v2279 = vadd.f32 %v2055, 0.5
    %v2280 = vadd.f32 %v2056, 0.5
    %v2281 = vadd.f32 %v2057, 0.5
    %v2282 = vadd.f32 %v2058, 0.5
    %v2283 = vadd.f32 %v2059, 0.5
    %v2284 = vadd.f32 %v2060, 0.5
    %v2285 = vadd.f32 %v2061, 0.5
    %v2286 = vadd.f32 %v2062, 0.5
    %v2287 = vadd.f32 %v2063, 0.5
    %v2288 = vadd.f32 %v2064, 0.5
    %v2289 = vadd.f32 %v2065, 0.5
    %v2290 = vadd.f32 %v2066, 0.5
    %v2291 = vadd.f32 %v2067, 0.5
    %v2292 = vadd.f32 %v2068, 0.5
    %v2293 = vadd.f32 %v2069, 0.5
    %v2294 = vadd.f32 %v2070, 0.5
    %v2295 = vadd.f32 %v2071, 0.5
    %v2296 = vadd.f32 %v2072, 0.5
    %v2297 = vadd.f32 %v2073, 0.5
    %v2298 = vadd.f32 %v2074, 0.5
    %v2299 = vadd.f32 %v2075, 0.5
    %v2300 = vadd.f32 %v2076, 0.5
    %v2301 = vadd.f32 %v2077, 0.5
    %v2302 = vadd.f32 %v2078, 0.5
    %v2303 = vadd.f32 %v2079, 0.5
    %v2304 = vadd.f32 %v2080, 0.5
    %v2305 = vadd.f32 %v2081, 0.5
    %v2306 = vadd.f32 %v2082, 0.5
    %v2307 = vadd.f32 %v2083, 0.5
    %v2308 = vadd.f32 %v2084, 0.5
    %v2309 = vadd.f32 %v2085, 0.5
    %v2310 = vadd.f32 %v2086, 0.5
    %v2311 = vadd.f32 %v2087, 0.5
    %v2312 = vadd.f32 %v2088, 0.5
    %v2313 = vadd.f32 %v2089, 0.5
    %v2314 = vadd.f32 %v2090, 0.5
    %v2315 = vadd.f32 %v2091, 0.5
    %v2316 = vadd.f32 %v2092, 0.5
    %v2317 = vadd.f32 %v2093, 0.5
    %v2318 = vadd.f32 %v2094, 0.5
    %v2319 = vadd.f32 %v2095, 0.5
    %v2320 = vadd.f32 %v2096, 0.5
    %v2321 = vadd.f32 %v2097, 0.5
    %v2322 = vadd.f32 %v2098, 0.5
    %v2323 = vadd.f32 %v2099, 0.5
    %v2324 = vadd.f32 %v2100, 0.5
    %v2325 = vadd.f32 %v2101, 0.5
    %v2326 = vadd.f32 %v2102, 0.5
    %v2327 = vadd.f32 %v2103, 0.5
    %v2328 = vadd.f32 %v2104, 0.5
    %v2329 = vadd.f32 %v2105, 0.5
    %v2330 = vadd.f32 %v2106, 0.5
    %v2331 = vadd.f32 %v2107, 0.5
    %v2332 = vadd.f32 %v2108, 0.5
    %v2333 = vadd.f32 %v2109, 0.5
    %v2334 = vadd.f32 %v2110, 0.5
    %v2335 = vadd.f32 %v2111, 0.5
    %v2336 = vadd.f32 %v2112, 0.5
    %v2337 = vadd.f32 %v2113, 0.5
    %v2338 = vadd.f32 %v2114, 0.5
    %v2339 = vadd.f32 %v2115, 0.5
    %v2340 = vadd.f32 %v2116, 0.5
    %v2341 = vadd.f32 %v2117, 0.5
    %v2342 = vadd.f32 %v2118, 0.5
    %v2343 = vadd.f32 %v2119, 0.5
    %v2344 = vadd.f32 %v2120, 0.5
    %v2345 = vadd.f32 %v2121, 0.5
    %v2346 = vadd.f32 %v2122, 0.5
    %v2347 = vadd.f32 %v2123, 0.5
    %v2348 = vadd.f32 %v2124, 0.5
    %v2349 = vadd.f32 %v2125, 0.5
    %v2350 = vadd.f32 %v2126, 0.5
    %v2351 = vadd.f32 %v2127, 0.5
    %v2352 = vadd.f32 %v2128, 0.5
    %v2353 = vadd.f32 %v2129, 0.5
    %v2354 = vadd.f32 %v2130, 0.5
    %v2355 = vadd.f32 %v2131, 0.5
    %v2356 = vadd.f32 %v2132, 0.5
    %v2357 = vadd.f32 %v2133, 0.5
    %v2358 = vadd.f32 %v2134, 0.5
    %v2359 = vadd.f32 %v2135, 0.5
    %v2360 = vadd.f32 %v2136, 0.5
    %v2361 = vadd.f32 %v2137, 0.5
    %v2362 = vadd.f32 %v2138, 0.5
    %v2363 = vadd.f32 %v2139, 0.5
    %v2364 = vadd.f32 %v2140, 0.5
    %v2365 = vadd.f32 %v2141, 0.5
    %v2366 = vadd.f32 %v2142, 0.5
    %v2367 = vadd.f32 %v2143, 0.5
    %v2368 = vadd.f32 %v2144, 0.5
    %v2369 = vadd.f32 %v2145, 0.5
    %v2370 = vadd.f32 %v2146, 0.5
    %v2371 = vadd.f32 %v2147, 0.5
    %v2372 = vadd.f32 %v2148, 0.5
    %v2373 = vadd.f32 %v2149, 0.5
    %v2374 = vadd.f32 %v2150, 0.5
    %v2375 = vadd.f32 %v2151, 0.5
    %v2376 = vadd.f32 %v2152, 0.5
    %v2377 = vadd.f32 %v2153, 0.5
    %v2378 = vadd.f32 %v2154, 0.5
    %v2379 = vadd.f32 %v2155, 0.5
    %v2380 = vadd.f32 %v2156, 0.5
    %v2381 = vadd.f32 %v2157, 0.5
    %v2382 = vadd.f32 %v2158, 0.5
    %v2383 = vadd.f32 %v2159, 0.5
    %v2384 = vadd.f32 %v2160, 0.5
    %v2385 = vadd.f32 %v2161, 0.5
    %v2386 = vadd.f32 %v2162, 0.5
    %v2387 = vadd.f32 %v2163, 0.5
    %v2388 = vadd.f32 %v2164, 0.5
    %v2389 = vadd.f32 %v2165, 0.5
    %v2390 = vadd.f32 %v2166, 0.5
    %v2391 = vadd.f32 %v2167, 0.5
    %v2392 = vadd.f32 %v2168, 0.5
    %v2393 = vadd.f32 %v2169, 0.5
    %v2394 = vadd.f32 %v2170, 0.5
    %v2395 = vadd.f32 %v2171, 0.5
    %v2396 = vadd.f32 %v2172, 0.5
    %v2397 = vadd.f32 %v2173, 0.5
    %v2398 = vadd.f32 %v2174, 0.5
    %v2399 = vadd.f32 %v2175, 0.5
    %v2400 = vadd.f32 %v2176, 0.5
    %v2401 = vadd.f32 %v2177, 0.5
    %v2402 = vadd.f32 %v2178, 0.5
    %v2403 = vadd.f32 %v2179, 0.5
    %v2404 = vadd.f32 %v2180, 0.5
    %v2405 = vadd.f32 %v2181, 0.5
    %v2406 = vadd.f32 %v2182, 0.5
    %v2407 = vadd.f32 %v2183, 0.5
    %v2408 = vadd.f32 %v2184, 0.5
    %v2409 = vadd.f32 %v2185, 0.5
    %v2410 = vadd.f32 %v2186, 0.5
    %v2411 = vadd.f32 %v2187, 0.5
    %v2412 = vadd.f32 %v2188, 0.5
    %v2413 = vadd.f32 %v2189, 0.5
    %v2414 = vadd.f32 %v2190, 0.5
    %v2415 = vadd.f32 %v2191, 0.5
    %v2416 = vadd.f32 %v2192, 0.5
    %v2417 = vadd.f32 %v2193, 0.5
    %v2418 = vadd.f32 %v2194, 0.5
    %v2419 = vadd.f32 %v2195, 0.5
    %v2420 = vadd.f32 %v2196, 0.5
    %v2421 = vadd.f32 %v2197, 0.5
    %v2422 = vadd.f32 %v2198, 0.5
    %v2423 = vadd.f32 %v2199, 0.5
    %v2424 = vadd.f32 %v2200, 0.5
    %v2425 = vadd.f32 %v2201, 0.5
    %v2426 = vadd.f32 %v2202, 0.5
    %v2427 = vadd.f32 %v2203, 0.5
    %v2428 = vadd.f32 %v2204, 0.5
    %v2429 = vadd.f32 %v2205, 0.5
    %v2430 = vadd.f32 %v2206, 0.5
    %v2431 = vadd.f32 %v2207, 0.5
    %v2432 = vadd.f32 %v2208, 0.5
    %v2433 = vadd.f32 %v2209, 0.5
    %v2434 = vadd.f32 %v2210, 0.5
    %v2435 = vadd.f32 %v2211, 0.5
    %v2436 = vadd.f32 %v2212, 0.5
    %v2437 = vadd.f32 %v2213, 0.5
    %v2438 = vadd.f32 %v2214, 0.5
    %v2439 = vadd.f32 %v2215, 0.5
    %v2440 = vadd.f32 %v2216, 0.5
    %v2441 = vadd.f32 %v2217, 0.5
    %v2442 = vadd.f32 %v2218, 0.5
    %v2443 = vadd.f32 %v2219, 0.5
    %v2444 = vadd.f32 %v2220, 0.5
    %v2445 = vadd.f32 %v2221, 0.5
    %v2446 = vadd.f32 %v2222, 0.5
    %v2447 = vadd.f32 %v2223, 0.5
    %v2448 = vadd.f32 %v2224, 0.5
    %v2449 = vadd.f32 %v2225, 0.5
    %v2450 = vadd.f32 %v2226, 0.5
    %v2451 = vadd.f32 %v2227, 0.5
    %v2452 = vadd.f32 %v2228, 0.5
    %v2453 = vadd.f32 %v2229, 0.5
    %v2454 = vadd.f32 %v2230, 0.5
    %v2455 = vadd.f32 %v2231, 0.5
    %v2456 = vadd.f32 %v2232, 0.5
    %v2457 = vadd.f32 %v2233, 0.5
    %v2458 = vadd.f32 %v2234, 0.5
    %v2459 = vadd.f32 %v2235, 0.5
    %v2460 = vadd.f32 %v2236, 0.5
    %v2461 = vadd.f32 %v2237, 0.5
    %v2462 = vadd.f32 %v2238, 0.5
    %v2463 = vadd.f32 %v2239, 0.5
    %v2464 = vadd.f32 %v2240, 0.5
    %v2465 = vadd.f32 %v2241, 0.5
    %v2466 = vadd.f32 %v2242, 0.5
    %v2467 = vadd.f32 %v2243, 0.5
    %v2468 = vadd.f32 %v2244, 0.5
    %v2469 = vadd.f32 %v2245, 0.5
    %v2470 = vadd.f32 %v2246, 0.5
    %v2471 = vadd.f32 %v2247, 0.5
    %v2472 = vadd.f32 %v2248, 0.5
    %v2473 = vadd.f32 %v2249, 0.5
    %v2474 = vadd.f32 %v2250, 0.5
    %v2475 = vadd.f32 %v2251, 0.5
    %v2476 = vadd.f32 %v2252, 0.5
    %v2477 = vadd.f32 %v2253, 0.5
    %v2478 = vadd.f32 %v2254, 0.5
    %v2479 = vadd.f32 %v2255, 0.5
    %v2480 = vadd.f32 %v2256, 0.5
    %v2481 = vadd.f32 %v2257, 0.5
    %v2482 = vpack.c.bf16 %v2259, %v2258
    %v2483 = vpack.c.bf16 %v2261, %v2260
    %v2484 = vpack.c.bf16 %v2263, %v2262
    %v2485 = vpack.c.bf16 %v2264, %v2264
    %v2486 = vpack.c.bf16 %v2266, %v2265
    %v2487 = vpack.c.bf16 %v2268, %v2267
    %v2488 = vpack.c.bf16 %v2270, %v2269
    %v2489 = vpack.c.bf16 %v2271, %v2271
    %v2490 = vpack.c.bf16 %v2273, %v2272
    %v2491 = vpack.c.bf16 %v2275, %v2274
    %v2492 = vpack.c.bf16 %v2277, %v2276
    %v2493 = vpack.c.bf16 %v2278, %v2278
    %v2494 = vpack.c.bf16 %v2280, %v2279
    %v2495 = vpack.c.bf16 %v2282, %v2281
    %v2496 = vpack.c.bf16 %v2284, %v2283
    %v2497 = vpack.c.bf16 %v2285, %v2285
    %v2498 = vpack.c.bf16 %v2287, %v2286
    %v2499 = vpack.c.bf16 %v2289, %v2288
    %v2500 = vpack.c.bf16 %v2291, %v2290
    %v2501 = vpack.c.bf16 %v2292, %v2292
    %v2502 = vpack.c.bf16 %v2294, %v2293
    %v2503 = vpack.c.bf16 %v2296, %v2295
    %v2504 = vpack.c.bf16 %v2298, %v2297
    %v2505 = vpack.c.bf16 %v2299, %v2299
    %v2506 = vpack.c.bf16 %v2301, %v2300
    %v2507 = vpack.c.bf16 %v2303, %v2302
    %v2508 = vpack.c.bf16 %v2305, %v2304
    %v2509 = vpack.c.bf16 %v2306, %v2306
    %v2510 = vpack.c.bf16 %v2308, %v2307
    %v2511 = vpack.c.bf16 %v2310, %v2309
    %v2512 = vpack.c.bf16 %v2312, %v2311
    %v2513 = vpack.c.bf16 %v2313, %v2313
    %v2514 = vpack.c.bf16 %v2315, %v2314
    %v2515 = vpack.c.bf16 %v2317, %v2316
    %v2516 = vpack.c.bf16 %v2319, %v2318
    %v2517 = vpack.c.bf16 %v2320, %v2320
    %v2518 = vpack.c.bf16 %v2322, %v2321
    %v2519 = vpack.c.bf16 %v2324, %v2323
    %v2520 = vpack.c.bf16 %v2326, %v2325
    %v2521 = vpack.c.bf16 %v2327, %v2327
    %v2522 = vpack.c.bf16 %v2329, %v2328
    %v2523 = vpack.c.bf16 %v2331, %v2330
    %v2524 = vpack.c.bf16 %v2333, %v2332
    %v2525 = vpack.c.bf16 %v2334, %v2334
    %v2526 = vpack.c.bf16 %v2336, %v2335
    %v2527 = vpack.c.bf16 %v2338, %v2337
    %v2528 = vpack.c.bf16 %v2340, %v2339
    %v2529 = vpack.c.bf16 %v2341, %v2341
    %v2530 = vpack.c.bf16 %v2343, %v2342
    %v2531 = vpack.c.bf16 %v2345, %v2344
    %v2532 = vpack.c.bf16 %v2347, %v2346
    %v2533 = vpack.c.bf16 %v2348, %v2348
    %v2534 = vpack.c.bf16 %v2350, %v2349
    %v2535 = vpack.c.bf16 %v2352, %v2351
    %v2536 = vpack.c.bf16 %v2354, %v2353
    %v2537 = vpack.c.bf16 %v2355, %v2355
    %v2538 = vpack.c.bf16 %v2357, %v2356
    %v2539 = vpack.c.bf16 %v2359, %v2358
    %v2540 = vpack.c.bf16 %v2361, %v2360
    %v2541 = vpack.c.bf16 %v2362, %v2362
    %v2542 = vpack.c.bf16 %v2364, %v2363
    %v2543 = vpack.c.bf16 %v2366, %v2365
    %v2544 = vpack.c.bf16 %v2368, %v2367
    %v2545 = vpack.c.bf16 %v2369, %v2369
    %v2546 = vpack.c.bf16 %v2371, %v2370
    %v2547 = vpack.c.bf16 %v2373, %v2372
    %v2548 = vpack.c.bf16 %v2375, %v2374
    %v2549 = vpack.c.bf16 %v2376, %v2376
    %v2550 = vpack.c.bf16 %v2378, %v2377
    %v2551 = vpack.c.bf16 %v2380, %v2379
    %v2552 = vpack.c.bf16 %v2382, %v2381
    %v2553 = vpack.c.bf16 %v2383, %v2383
    %v2554 = vpack.c.bf16 %v2385, %v2384
    %v2555 = vpack.c.bf16 %v2387, %v2386
    %v2556 = vpack.c.bf16 %v2389, %v2388
    %v2557 = vpack.c.bf16 %v2390, %v2390
    %v2558 = vpack.c.bf16 %v2392, %v2391
    %v2559 = vpack.c.bf16 %v2394, %v2393
    %v2560 = vpack.c.bf16 %v2396, %v2395
    %v2561 = vpack.c.bf16 %v2397, %v2397
    %v2562 = vpack.c.bf16 %v2399, %v2398
    %v2563 = vpack.c.bf16 %v2401, %v2400
    %v2564 = vpack.c.bf16 %v2403, %v2402
    %v2565 = vpack.c.bf16 %v2404, %v2404
    %v2566 = vpack.c.bf16 %v2406, %v2405
    %v2567 = vpack.c.bf16 %v2408, %v2407
    %v2568 = vpack.c.bf16 %v2410, %v2409
    %v2569 = vpack.c.bf16 %v2411, %v2411
    %v2570 = vpack.c.bf16 %v2413, %v2412
    %v2571 = vpack.c.bf16 %v2415, %v2414
    %v2572 = vpack.c.bf16 %v2417, %v2416
    %v2573 = vpack.c.bf16 %v2418, %v2418
    %v2574 = vpack.c.bf16 %v2420, %v2419
    %v2575 = vpack.c.bf16 %v2422, %v2421
    %v2576 = vpack.c.bf16 %v2424, %v2423
    %v2577 = vpack.c.bf16 %v2425, %v2425
    %v2578 = vpack.c.bf16 %v2427, %v2426
    %v2579 = vpack.c.bf16 %v2429, %v2428
    %v2580 = vpack.c.bf16 %v2431, %v2430
    %v2581 = vpack.c.bf16 %v2432, %v2432
    %v2582 = vpack.c.bf16 %v2434, %v2433
    %v2583 = vpack.c.bf16 %v2436, %v2435
    %v2584 = vpack.c.bf16 %v2438, %v2437
    %v2585 = vpack.c.bf16 %v2439, %v2439
    %v2586 = vpack.c.bf16 %v2441, %v2440
    %v2587 = vpack.c.bf16 %v2443, %v2442
    %v2588 = vpack.c.bf16 %v2445, %v2444
    %v2589 = vpack.c.bf16 %v2446, %v2446
    %v2590 = vpack.c.bf16 %v2448, %v2447
    %v2591 = vpack.c.bf16 %v2450, %v2449
    %v2592 = vpack.c.bf16 %v2452, %v2451
    %v2593 = vpack.c.bf16 %v2453, %v2453
    %v2594 = vpack.c.bf16 %v2455, %v2454
    %v2595 = vpack.c.bf16 %v2457, %v2456
    %v2596 = vpack.c.bf16 %v2459, %v2458
    %v2597 = vpack.c.bf16 %v2460, %v2460
    %v2598 = vpack.c.bf16 %v2462, %v2461
    %v2599 = vpack.c.bf16 %v2464, %v2463
    %v2600 = vpack.c.bf16 %v2466, %v2465
    %v2601 = vpack.c.bf16 %v2467, %v2467
    %v2602 = vpack.c.bf16 %v2469, %v2468
    %v2603 = vpack.c.bf16 %v2471, %v2470
    %v2604 = vpack.c.bf16 %v2473, %v2472
    %v2605 = vpack.c.bf16 %v2474, %v2474
    %v2606 = vpack.c.bf16 %v2476, %v2475
    %v2607 = vpack.c.bf16 %v2478, %v2477
    %v2608 = vpack.c.bf16 %v2480, %v2479
    %v2609 = vpack.c.bf16 %v2481, %v2481
    %2610 = vst [vmem:[#allocation11] sm:$0xff] %v2482
    %2611 = vst [vmem:[#allocation11 + $0x8] sm:$0xff] %v2483
    %2612 = vst [vmem:[#allocation11 + $0x10] sm:$0xff] %v2484
    %2613 = vst [vmem:[#allocation11 + $0x18] sm:$0xf] %v2485
    %2614 = vst [vmem:[#allocation11 + $0x1c] sm:$0xff] %v2486
    %2615 = vst [vmem:[#allocation11 + $0x24] sm:$0xff] %v2487
    %2616 = vst [vmem:[#allocation11 + $0x2c] sm:$0xff] %v2488
    %2617 = vst [vmem:[#allocation11 + $0x34] sm:$0xf] %v2489
    %2618 = vst [vmem:[#allocation11 + $0x38] sm:$0xff] %v2490
    %2619 = vst [vmem:[#allocation11 + $0x40] sm:$0xff] %v2491
    %2620 = vst [vmem:[#allocation11 + $0x48] sm:$0xff] %v2492
    %2621 = vst [vmem:[#allocation11 + $0x50] sm:$0xf] %v2493
    %2622 = vst [vmem:[#allocation11 + $0x54] sm:$0xff] %v2494
    %2623 = vst [vmem:[#allocation11 + $0x5c] sm:$0xff] %v2495
    %2624 = vst [vmem:[#allocation11 + $0x64] sm:$0xff] %v2496
    %2625 = vst [vmem:[#allocation11 + $0x6c] sm:$0xf] %v2497
    %2626 = vst [vmem:[#allocation11 + $0x70] sm:$0xff] %v2498
    %2627 = vst [vmem:[#allocation11 + $0x78] sm:$0xff] %v2499
    %2628 = vst [vmem:[#allocation11 + $0x80] sm:$0xff] %v2500
    %2629 = vst [vmem:[#allocation11 + $0x88] sm:$0xf] %v2501
    %2630 = vst [vmem:[#allocation11 + $0x8c] sm:$0xff] %v2502
    %2631 = vst [vmem:[#allocation11 + $0x94] sm:$0xff] %v2503
    %2632 = vst [vmem:[#allocation11 + $0x9c] sm:$0xff] %v2504
    %2633 = vst [vmem:[#allocation11 + $0xa4] sm:$0xf] %v2505
    %2634 = vst [vmem:[#allocation11 + $0xa8] sm:$0xff] %v2506
    %2635 = vst [vmem:[#allocation11 + $0xb0] sm:$0xff] %v2507
    %2636 = vst [vmem:[#allocation11 + $0xb8] sm:$0xff] %v2508
    %2637 = vst [vmem:[#allocation11 + $0xc0] sm:$0xf] %v2509
    %2638 = vst [vmem:[#allocation11 + $0xc4] sm:$0xff] %v2510
    %2639 = vst [vmem:[#allocation11 + $0xcc] sm:$0xff] %v2511
    %2640 = vst [vmem:[#allocation11 + $0xd4] sm:$0xff] %v2512
    %2641 = vst [vmem:[#allocation11 + $0xdc] sm:$0xf] %v2513
    %2642 = vst [vmem:[#allocation11 + $0xe0] sm:$0xff] %v2514
    %2643 = vst [vmem:[#allocation11 + $0xe8] sm:$0xff] %v2515
    %2644 = vst [vmem:[#allocation11 + $0xf0] sm:$0xff] %v2516
    %2645 = vst [vmem:[#allocation11 + $0xf8] sm:$0xf] %v2517
    %2646 = vst [vmem:[#allocation11 + $0xfc] sm:$0xff] %v2518
    %2647 = vst [vmem:[#allocation11 + $0x104] sm:$0xff] %v2519
    %2648 = vst [vmem:[#allocation11 + $0x10c] sm:$0xff] %v2520
    %2649 = vst [vmem:[#allocation11 + $0x114] sm:$0xf] %v2521
    %2650 = vst [vmem:[#allocation11 + $0x118] sm:$0xff] %v2522
    %2651 = vst [vmem:[#allocation11 + $0x120] sm:$0xff] %v2523
    %2652 = vst [vmem:[#allocation11 + $0x128] sm:$0xff] %v2524
    %2653 = vst [vmem:[#allocation11 + $0x130] sm:$0xf] %v2525
    %2654 = vst [vmem:[#allocation11 + $0x134] sm:$0xff] %v2526
    %2655 = vst [vmem:[#allocation11 + $0x13c] sm:$0xff] %v2527
    %2656 = vst [vmem:[#allocation11 + $0x144] sm:$0xff] %v2528
    %2657 = vst [vmem:[#allocation11 + $0x14c] sm:$0xf] %v2529
    %2658 = vst [vmem:[#allocation11 + $0x150] sm:$0xff] %v2530
    %2659 = vst [vmem:[#allocation11 + $0x158] sm:$0xff] %v2531
    %2660 = vst [vmem:[#allocation11 + $0x160] sm:$0xff] %v2532
    %2661 = vst [vmem:[#allocation11 + $0x168] sm:$0xf] %v2533
    %2662 = vst [vmem:[#allocation11 + $0x16c] sm:$0xff] %v2534
    %2663 = vst [vmem:[#allocation11 + $0x174] sm:$0xff] %v2535
    %2664 = vst [vmem:[#allocation11 + $0x17c] sm:$0xff] %v2536
    %2665 = vst [vmem:[#allocation11 + $0x184] sm:$0xf] %v2537
    %2666 = vst [vmem:[#allocation11 + $0x188] sm:$0xff] %v2538
    %2667 = vst [vmem:[#allocation11 + $0x190] sm:$0xff] %v2539
    %2668 = vst [vmem:[#allocation11 + $0x198] sm:$0xff] %v2540
    %2669 = vst [vmem:[#allocation11 + $0x1a0] sm:$0xf] %v2541
    %2670 = vst [vmem:[#allocation11 + $0x1a4] sm:$0xff] %v2542
    %2671 = vst [vmem:[#allocation11 + $0x1ac] sm:$0xff] %v2543
    %2672 = vst [vmem:[#allocation11 + $0x1b4] sm:$0xff] %v2544
    %2673 = vst [vmem:[#allocation11 + $0x1bc] sm:$0xf] %v2545
    %2674 = vst [vmem:[#allocation11 + $0x1c0] sm:$0xff] %v2546
    %2675 = vst [vmem:[#allocation11 + $0x1c8] sm:$0xff] %v2547
    %2676 = vst [vmem:[#allocation11 + $0x1d0] sm:$0xff] %v2548
    %2677 = vst [vmem:[#allocation11 + $0x1d8] sm:$0xf] %v2549
    %2678 = vst [vmem:[#allocation11 + $0x1dc] sm:$0xff] %v2550
    %2679 = vst [vmem:[#allocation11 + $0x1e4] sm:$0xff] %v2551
    %2680 = vst [vmem:[#allocation11 + $0x1ec] sm:$0xff] %v2552
    %2681 = vst [vmem:[#allocation11 + $0x1f4] sm:$0xf] %v2553
    %2682 = vst [vmem:[#allocation11 + $0x1f8] sm:$0xff] %v2554
    %2683 = vst [vmem:[#allocation11 + $0x200] sm:$0xff] %v2555
    %2684 = vst [vmem:[#allocation11 + $0x208] sm:$0xff] %v2556
    %2685 = vst [vmem:[#allocation11 + $0x210] sm:$0xf] %v2557
    %2686 = vst [vmem:[#allocation11 + $0x214] sm:$0xff] %v2558
    %2687 = vst [vmem:[#allocation11 + $0x21c] sm:$0xff] %v2559
    %2688 = vst [vmem:[#allocation11 + $0x224] sm:$0xff] %v2560
    %2689 = vst [vmem:[#allocation11 + $0x22c] sm:$0xf] %v2561
    %2690 = vst [vmem:[#allocation11 + $0x230] sm:$0xff] %v2562
    %2691 = vst [vmem:[#allocation11 + $0x238] sm:$0xff] %v2563
    %2692 = vst [vmem:[#allocation11 + $0x240] sm:$0xff] %v2564
    %2693 = vst [vmem:[#allocation11 + $0x248] sm:$0xf] %v2565
    %2694 = vst [vmem:[#allocation11 + $0x24c] sm:$0xff] %v2566
    %2695 = vst [vmem:[#allocation11 + $0x254] sm:$0xff] %v2567
    %2696 = vst [vmem:[#allocation11 + $0x25c] sm:$0xff] %v2568
    %2697 = vst [vmem:[#allocation11 + $0x264] sm:$0xf] %v2569
    %2698 = vst [vmem:[#allocation11 + $0x268] sm:$0xff] %v2570
    %2699 = vst [vmem:[#allocation11 + $0x270] sm:$0xff] %v2571
    %2700 = vst [vmem:[#allocation11 + $0x278] sm:$0xff] %v2572
    %2701 = vst [vmem:[#allocation11 + $0x280] sm:$0xf] %v2573
    %2702 = vst [vmem:[#allocation11 + $0x284] sm:$0xff] %v2574
    %2703 = vst [vmem:[#allocation11 + $0x28c] sm:$0xff] %v2575
    %2704 = vst [vmem:[#allocation11 + $0x294] sm:$0xff] %v2576
    %2705 = vst [vmem:[#allocation11 + $0x29c] sm:$0xf] %v2577
    %2706 = vst [vmem:[#allocation11 + $0x2a0] sm:$0xff] %v2578
    %2707 = vst [vmem:[#allocation11 + $0x2a8] sm:$0xff] %v2579
    %2708 = vst [vmem:[#allocation11 + $0x2b0] sm:$0xff] %v2580
    %2709 = vst [vmem:[#allocation11 + $0x2b8] sm:$0xf] %v2581
    %2710 = vst [vmem:[#allocation11 + $0x2bc] sm:$0xff] %v2582
    %2711 = vst [vmem:[#allocation11 + $0x2c4] sm:$0xff] %v2583
    %2712 = vst [vmem:[#allocation11 + $0x2cc] sm:$0xff] %v2584
    %2713 = vst [vmem:[#allocation11 + $0x2d4] sm:$0xf] %v2585
    %2714 = vst [vmem:[#allocation11 + $0x2d8] sm:$0xff] %v2586
    %2715 = vst [vmem:[#allocation11 + $0x2e0] sm:$0xff] %v2587
    %2716 = vst [vmem:[#allocation11 + $0x2e8] sm:$0xff] %v2588
    %2717 = vst [vmem:[#allocation11 + $0x2f0] sm:$0xf] %v2589
    %2718 = vst [vmem:[#allocation11 + $0x2f4] sm:$0xff] %v2590
    %2719 = vst [vmem:[#allocation11 + $0x2fc] sm:$0xff] %v2591
    %2720 = vst [vmem:[#allocation11 + $0x304] sm:$0xff] %v2592
    %2721 = vst [vmem:[#allocation11 + $0x30c] sm:$0xf] %v2593
    %2722 = vst [vmem:[#allocation11 + $0x310] sm:$0xff] %v2594
    %2723 = vst [vmem:[#allocation11 + $0x318] sm:$0xff] %v2595
    %2724 = vst [vmem:[#allocation11 + $0x320] sm:$0xff] %v2596
    %2725 = vst [vmem:[#allocation11 + $0x328] sm:$0xf] %v2597
    %2726 = vst [vmem:[#allocation11 + $0x32c] sm:$0xff] %v2598
    %2727 = vst [vmem:[#allocation11 + $0x334] sm:$0xff] %v2599
    %2728 = vst [vmem:[#allocation11 + $0x33c] sm:$0xff] %v2600
    %2729 = vst [vmem:[#allocation11 + $0x344] sm:$0xf] %v2601
    %2730 = vst [vmem:[#allocation11 + $0x348] sm:$0xff] %v2602
    %2731 = vst [vmem:[#allocation11 + $0x350] sm:$0xff] %v2603
    %2732 = vst [vmem:[#allocation11 + $0x358] sm:$0xff] %v2604
    %2733 = vst [vmem:[#allocation11 + $0x360] sm:$0xf] %v2605
    %2734 = vst [vmem:[#allocation11 + $0x364] sm:$0xff] %v2606
    %2735 = vst [vmem:[#allocation11 + $0x36c] sm:$0xff] %v2607
    %2736 = vst [vmem:[#allocation11 + $0x374] sm:$0xff] %v2608
    %2737 = vst [vmem:[#allocation11 + $0x37c] sm:$0xf] %v2609
    // Predicated region
    $region42: #{tpu_custom_call.1} parent=1 // pred_check
      _
    $region43: #{tpu_custom_call.1} parent=1 // pred_check_branch
      %2739 = sbr.rel (0) target = $region45
    $region44: #{tpu_custom_call.1} parent=1 // pred_region
      %2741 = vsyncadd [#allocation5], 0
      %s2742 = sshll.u32 [#allocation11], 4
      %s2743 = int_to_ptr.vmem [resolvable:$true] %s2742
      %s2744 = sshll.u32 %s5, 4
      %s2745 = int_to_ptr.hbm [resolvable:$true] %s2744
      %2750 = dma.vmem_to_hbm [thread:$0]  %s2743, 14336, %s2745, [#allocation5], 448, 448, 28
    $region45: #{tpu_custom_call.1} parent=1 // pred_fallthru
      _
    // Predicated region
    $region46: #{tpu_custom_call.1} parent=1 // pred_check
      _
    $region47: #{tpu_custom_call.1} parent=1 // pred_check_branch
      %2752 = sbr.rel (0) target = $region49
    $region48: #{tpu_custom_call.1} parent=1 // pred_region
      %2754 = dma.done [#allocation5], 14336
    $region49: #{tpu_custom_call.1} parent=1 // pred_fallthru
      _
    %2755 = vsyncpa [#allocation4], 1
    %2756 = vsyncpa [#allocation7], 1
    %2757 = vsyncpa [#allocation10], 1
    %2758 = vsyncpa [#allocation5], 1

</llo_original>
